<compile_context>
chip_gen: v7x
topology: tpu7x:2x2x1
jax: 0.10.0
libtpu: 0.0.40
codegen_flags: <defaults>
</compile_context>

<pallas_src>
import functools

import jax
import jax.numpy as jnp
from jax.experimental import pallas as pl
from jax.experimental.pallas import tpu as pltpu

EPS = 1e-5


def _residual_block_kernel(x_ref, w1_ref, w2_ref, p_ref, m_ref, out_ref, *, width):
    # x_ref:  (1, C, HW)  this batch element's activations, lane axis = HW
    # w*_ref: (9, C, C)   conv taps, [t, c_out, c_in], t = kh*3 + kw
    # p_ref:  (C, 4)      packed affine params: columns [g1, b1, g2, b2]
    # m_ref:  (9, HW)     per-tap validity masks (zero-padding emulation)
    _, C, HW = x_ref.shape
    x = x_ref[0]                                   # (C, HW) f32

    # Hoist affine params once (column slices -> (C, 1), broadcast over lanes).
    g1 = p_ref[:, 0:1]
    b1 = p_ref[:, 1:2]
    g2 = p_ref[:, 2:3]
    b2 = p_ref[:, 3:4]

    def conv3x3(inp, w_ref):
        # 3x3 / pad=1 conv as 9 lane-rolled, border-masked MXU matmuls.
        acc = None
        for t in range(9):
            dh, dw = t // 3 - 1, t % 3 - 1
            off = dh * width + dw                  # flat spatial offset
            if off == 0:
                tap_in = inp                       # center tap: no shift / mask
            else:
                shifted = pltpu.roll(inp, (-off) % HW, 1)   # XLU lane rotate
                tap_in = shifted * m_ref[t:t + 1, :]        # zero wrapped border
            contrib = jnp.dot(w_ref[t], tap_in,
                              preferred_element_type=jnp.float32)  # (C, HW)
            acc = contrib if acc is None else acc + contrib
        return acc

    def instance_norm(y, g, b):
        # Per-channel stats over HW (lane-axis reduce -> XLU), biased variance.
        mean = jnp.mean(y, axis=1, keepdims=True)
        cent = y - mean
        var = jnp.mean(cent * cent, axis=1, keepdims=True)
        return cent * jax.lax.rsqrt(var + EPS) * g + b

    y = conv3x3(x, w1_ref)
    y = jnp.maximum(instance_norm(y, g1, b1), 0.0)
    y = conv3x3(y, w2_ref)
    y = instance_norm(y, g2, b2)
    out_ref[0] = jnp.maximum(x + y, 0.0)


@jax.jit
def residual_block(x_nchw, w1, g1, b1, w2, g2, b2):
    """x_nchw: (N, C, H, W); w*: (Cout, Cin, 3, 3); g*/b*: (C,). Returns NCHW."""
    N, C, H, W = x_nchw.shape
    HW = H * W
    # NCHW flattened over (H, W) is already the lane-dense (C, HW) layout.
    x_flat = x_nchw.reshape(N, C, HW).astype(jnp.float32)

    def taps(w):  # (Cout, Cin, 3, 3) -> (9, Cout, Cin), t = kh*3 + kw
        return jnp.transpose(w, (2, 3, 0, 1)).reshape(9, C, C).astype(jnp.float32)

    w1_k = taps(w1)
    w2_k = taps(w2)
    params = jnp.stack([g1, b1, g2, b2], axis=1).astype(jnp.float32)   # (C, 4)

    # Per-tap validity masks for zero padding (computed once, wrapper-side XLA).
    hh = jnp.arange(H).reshape(H, 1)
    ww = jnp.arange(W).reshape(1, W)
    mask_rows = []
    for dh in (-1, 0, 1):
        for dw in (-1, 0, 1):
            valid = ((hh + dh >= 0) & (hh + dh < H)
                     & (ww + dw >= 0) & (ww + dw < W))
            mask_rows.append(valid.reshape(HW))
    masks = jnp.stack(mask_rows).astype(jnp.float32)                   # (9, HW)

    kernel = functools.partial(_residual_block_kernel, width=W)

    out_flat = pl.pallas_call(
        kernel,
        out_shape=jax.ShapeDtypeStruct((N, C, HW), jnp.float32),
        grid_spec=pltpu.PrefetchScalarGridSpec(
            num_scalar_prefetch=0,
            grid=(N,),
            in_specs=[
                pl.BlockSpec((1, C, HW), lambda n: (n, 0, 0)),   # activations
                pl.BlockSpec((9, C, C), lambda n: (0, 0, 0)),    # conv1 taps
                pl.BlockSpec((9, C, C), lambda n: (0, 0, 0)),    # conv2 taps
                pl.BlockSpec((C, 4), lambda n: (0, 0)),          # packed g/b
                pl.BlockSpec((9, HW), lambda n: (0, 0)),         # border masks
            ],
            out_specs=pl.BlockSpec((1, C, HW), lambda n: (n, 0, 0)),
        ),
        compiler_params=pltpu.CompilerParams(
            dimension_semantics=("parallel",)),
    )(x_flat, w1_k, w2_k, params, masks)

    return out_flat.reshape(N, C, H, W)


def _reference(x, w1, g1, b1, w2, g2, b2):
    # Pure-JAX reference mirroring the PyTorch module (NCHW).
    def conv(y, w):
        return jax.lax.conv_general_dilated(
            y, w, window_strides=(1, 1), padding=[(1, 1), (1, 1)],
            dimension_numbers=("NCHW", "OIHW", "NCHW"))

    def inorm(y, g, b):
        mean = jnp.mean(y, axis=(2, 3), keepdims=True)
        var = jnp.mean((y - mean) ** 2, axis=(2, 3), keepdims=True)
        return (y - mean) / jnp.sqrt(var + EPS) * g.reshape(1, -1, 1, 1) \
            + b.reshape(1, -1, 1, 1)

    y = jax.nn.relu(inorm(conv(x, w1), g1, b1))
    y = inorm(conv(y, w2), g2, b2)
    return jax.nn.relu(x + y)


if __name__ == "__main__":
    N, C, H, W = 2, 4, 16, 16
    key = jax.random.PRNGKey(0)
    kx, k1, k2, kg1, kb1, kg2, kb2 = jax.random.split(key, 7)

    x = jax.random.normal(kx, (N, C, H, W), jnp.float32)
    # Deterministic synthetic parameters (PyTorch shapes: (Cout, Cin, 3, 3), (C,))
    w1 = jax.random.normal(k1, (C, C, 3, 3), jnp.float32) * 0.2
    w2 = jax.random.normal(k2, (C, C, 3, 3), jnp.float32) * 0.2
    g1 = 1.0 + 0.1 * jax.random.normal(kg1, (C,), jnp.float32)
    b1 = 0.1 * jax.random.normal(kb1, (C,), jnp.float32)
    g2 = 1.0 + 0.1 * jax.random.normal(kg2, (C,), jnp.float32)
    b2 = 0.1 * jax.random.normal(kb2, (C,), jnp.float32)

    out = residual_block(x, w1, g1, b1, w2, g2, b2)
    out = jax.block_until_ready(out)

    ref = _reference(x, w1, g1, b1, w2, g2, b2)
    assert out.shape == (N, C, H, W)
    assert jnp.allclose(out, ref, atol=1e-4, rtol=1e-4)

    print("KERNEL_OK")
</pallas_src>

<mosaic_0001>
module attributes {stable_mosaic.version = 11 : i64} {
  func.func @_residual_block_kernel(%arg0: i32, %arg1: memref<1x4x256xf32, #tpu.memory_space<vmem>>, %arg2: memref<9x4x4xf32, #tpu.memory_space<vmem>>, %arg3: memref<9x4x4xf32, #tpu.memory_space<vmem>>, %arg4: memref<4x4xf32, #tpu.memory_space<vmem>>, %arg5: memref<9x256xf32, #tpu.memory_space<vmem>>, %arg6: memref<1x4x256xf32, #tpu.memory_space<vmem>>) attributes {dimension_semantics = [#tpu.dimension_semantics<parallel>], iteration_bounds = array<i64: 2>, scalar_prefetch = 0 : i64, scratch_operands = 0 : i64, tpu.core_type = #tpu.core_type<tc>, window_params = [{transform_indices = @transform_0, window_bounds = array<i64: 1, 4, 256>}, {pipeline_mode = #tpu.pipeline_mode<synchronous>, transform_indices = @transform_1, window_bounds = array<i64: 9, 4, 4>}, {pipeline_mode = #tpu.pipeline_mode<synchronous>, transform_indices = @transform_2, window_bounds = array<i64: 9, 4, 4>}, {pipeline_mode = #tpu.pipeline_mode<synchronous>, transform_indices = @transform_3, window_bounds = array<i64: 4, 4>}, {pipeline_mode = #tpu.pipeline_mode<synchronous>, transform_indices = @transform_4, window_bounds = array<i64: 9, 256>}, {transform_indices = @transform_5, window_bounds = array<i64: 1, 4, 256>}]} {
    %c0 = arith.constant 0 : index
    %c0_0 = arith.constant 0 : index
    %c0_1 = arith.constant 0 : index
    %0 = vector.load %arg1[%c0, %c0_0, %c0_1] : memref<1x4x256xf32, #tpu.memory_space<vmem>>, vector<1x4x256xf32>
    %1 = vector.shape_cast %0 : vector<1x4x256xf32> to vector<4x256xf32>
    %c0_2 = arith.constant 0 : index
    %c0_3 = arith.constant 0 : index
    %2 = vector.load %arg4[%c0_2, %c0_3] : memref<4x4xf32, #tpu.memory_space<vmem>>, vector<4x1xf32>
    %c0_4 = arith.constant 0 : index
    %c1 = arith.constant 1 : index
    %3 = vector.load %arg4[%c0_4, %c1] : memref<4x4xf32, #tpu.memory_space<vmem>>, vector<4x1xf32>
    %c0_5 = arith.constant 0 : index
    %c2 = arith.constant 2 : index
    %4 = vector.load %arg4[%c0_5, %c2] : memref<4x4xf32, #tpu.memory_space<vmem>>, vector<4x1xf32>
    %c0_6 = arith.constant 0 : index
    %c3 = arith.constant 3 : index
    %5 = vector.load %arg4[%c0_6, %c3] : memref<4x4xf32, #tpu.memory_space<vmem>>, vector<4x1xf32>
    %c17_i32 = arith.constant 17 : i32
    %6 = tpu.dynamic_rotate %1 by %c17_i32 dim 1 : vector<4x256xf32>, i32 -> vector<4x256xf32>
    %c0_7 = arith.constant 0 : index
    %c0_8 = arith.constant 0 : index
    %7 = vector.load %arg5[%c0_7, %c0_8] : memref<9x256xf32, #tpu.memory_space<vmem>>, vector<1x256xf32>
    %8 = vector.broadcast %7 : vector<1x256xf32> to vector<4x256xf32>
    %9 = arith.mulf %6, %8 : vector<4x256xf32>
    %c0_9 = arith.constant 0 : index
    %c0_10 = arith.constant 0 : index
    %c0_11 = arith.constant 0 : index
    %10 = vector.load %arg2[%c0_9, %c0_10, %c0_11] : memref<9x4x4xf32, #tpu.memory_space<vmem>>, vector<1x4x4xf32>
    %11 = vector.shape_cast %10 : vector<1x4x4xf32> to vector<4x4xf32>
    %cst = arith.constant dense<0.000000e+00> : vector<4x256xf32>
    %12 = tpu.matmul %11, %9, %cst {dimension_numbers = #tpu.dot_dimension_numbers<[1], [0], [0], [1], [0, 0, 1, 1], [], []>} : vector<4x4xf32>, vector<4x256xf32>, vector<4x256xf32> -> vector<4x256xf32>
    %c16_i32 = arith.constant 16 : i32
    %13 = tpu.dynamic_rotate %1 by %c16_i32 dim 1 : vector<4x256xf32>, i32 -> vector<4x256xf32>
    %c1_12 = arith.constant 1 : index
    %c0_13 = arith.constant 0 : index
    %14 = vector.load %arg5[%c1_12, %c0_13] : memref<9x256xf32, #tpu.memory_space<vmem>>, vector<1x256xf32>
    %15 = vector.broadcast %14 : vector<1x256xf32> to vector<4x256xf32>
    %16 = arith.mulf %13, %15 : vector<4x256xf32>
    %c1_14 = arith.constant 1 : index
    %c0_15 = arith.constant 0 : index
    %c0_16 = arith.constant 0 : index
    %17 = vector.load %arg2[%c1_14, %c0_15, %c0_16] : memref<9x4x4xf32, #tpu.memory_space<vmem>>, vector<1x4x4xf32>
    %18 = vector.shape_cast %17 : vector<1x4x4xf32> to vector<4x4xf32>
    %cst_17 = arith.constant dense<0.000000e+00> : vector<4x256xf32>
    %19 = tpu.matmul %18, %16, %cst_17 {dimension_numbers = #tpu.dot_dimension_numbers<[1], [0], [0], [1], [0, 0, 1, 1], [], []>} : vector<4x4xf32>, vector<4x256xf32>, vector<4x256xf32> -> vector<4x256xf32>
    %20 = arith.addf %12, %19 : vector<4x256xf32>
    %c15_i32 = arith.constant 15 : i32
    %21 = tpu.dynamic_rotate %1 by %c15_i32 dim 1 : vector<4x256xf32>, i32 -> vector<4x256xf32>
    %c2_18 = arith.constant 2 : index
    %c0_19 = arith.constant 0 : index
    %22 = vector.load %arg5[%c2_18, %c0_19] : memref<9x256xf32, #tpu.memory_space<vmem>>, vector<1x256xf32>
    %23 = vector.broadcast %22 : vector<1x256xf32> to vector<4x256xf32>
    %24 = arith.mulf %21, %23 : vector<4x256xf32>
    %c2_20 = arith.constant 2 : index
    %c0_21 = arith.constant 0 : index
    %c0_22 = arith.constant 0 : index
    %25 = vector.load %arg2[%c2_20, %c0_21, %c0_22] : memref<9x4x4xf32, #tpu.memory_space<vmem>>, vector<1x4x4xf32>
    %26 = vector.shape_cast %25 : vector<1x4x4xf32> to vector<4x4xf32>
    %cst_23 = arith.constant dense<0.000000e+00> : vector<4x256xf32>
    %27 = tpu.matmul %26, %24, %cst_23 {dimension_numbers = #tpu.dot_dimension_numbers<[1], [0], [0], [1], [0, 0, 1, 1], [], []>} : vector<4x4xf32>, vector<4x256xf32>, vector<4x256xf32> -> vector<4x256xf32>
    %28 = arith.addf %20, %27 : vector<4x256xf32>
    %c1_i32 = arith.constant 1 : i32
    %29 = tpu.dynamic_rotate %1 by %c1_i32 dim 1 : vector<4x256xf32>, i32 -> vector<4x256xf32>
    %c3_24 = arith.constant 3 : index
    %c0_25 = arith.constant 0 : index
    %30 = vector.load %arg5[%c3_24, %c0_25] : memref<9x256xf32, #tpu.memory_space<vmem>>, vector<1x256xf32>
    %31 = vector.broadcast %30 : vector<1x256xf32> to vector<4x256xf32>
    %32 = arith.mulf %29, %31 : vector<4x256xf32>
    %c3_26 = arith.constant 3 : index
    %c0_27 = arith.constant 0 : index
    %c0_28 = arith.constant 0 : index
    %33 = vector.load %arg2[%c3_26, %c0_27, %c0_28] : memref<9x4x4xf32, #tpu.memory_space<vmem>>, vector<1x4x4xf32>
    %34 = vector.shape_cast %33 : vector<1x4x4xf32> to vector<4x4xf32>
    %cst_29 = arith.constant dense<0.000000e+00> : vector<4x256xf32>
    %35 = tpu.matmul %34, %32, %cst_29 {dimension_numbers = #tpu.dot_dimension_numbers<[1], [0], [0], [1], [0, 0, 1, 1], [], []>} : vector<4x4xf32>, vector<4x256xf32>, vector<4x256xf32> -> vector<4x256xf32>
    %36 = arith.addf %28, %35 : vector<4x256xf32>
    %c4 = arith.constant 4 : index
    %c0_30 = arith.constant 0 : index
    %c0_31 = arith.constant 0 : index
    %37 = vector.load %arg2[%c4, %c0_30, %c0_31] : memref<9x4x4xf32, #tpu.memory_space<vmem>>, vector<1x4x4xf32>
    %38 = vector.shape_cast %37 : vector<1x4x4xf32> to vector<4x4xf32>
    %cst_32 = arith.constant dense<0.000000e+00> : vector<4x256xf32>
    %39 = tpu.matmul %38, %1, %cst_32 {dimension_numbers = #tpu.dot_dimension_numbers<[1], [0], [0], [1], [0, 0, 1, 1], [], []>} : vector<4x4xf32>, vector<4x256xf32>, vector<4x256xf32> -> vector<4x256xf32>
    %40 = arith.addf %36, %39 : vector<4x256xf32>
    %c255_i32 = arith.constant 255 : i32
    %41 = tpu.dynamic_rotate %1 by %c255_i32 dim 1 : vector<4x256xf32>, i32 -> vector<4x256xf32>
    %c5 = arith.constant 5 : index
    %c0_33 = arith.constant 0 : index
    %42 = vector.load %arg5[%c5, %c0_33] : memref<9x256xf32, #tpu.memory_space<vmem>>, vector<1x256xf32>
    %43 = vector.broadcast %42 : vector<1x256xf32> to vector<4x256xf32>
    %44 = arith.mulf %41, %43 : vector<4x256xf32>
    %c5_34 = arith.constant 5 : index
    %c0_35 = arith.constant 0 : index
    %c0_36 = arith.constant 0 : index
    %45 = vector.load %arg2[%c5_34, %c0_35, %c0_36] : memref<9x4x4xf32, #tpu.memory_space<vmem>>, vector<1x4x4xf32>
    %46 = vector.shape_cast %45 : vector<1x4x4xf32> to vector<4x4xf32>
    %cst_37 = arith.constant dense<0.000000e+00> : vector<4x256xf32>
    %47 = tpu.matmul %46, %44, %cst_37 {dimension_numbers = #tpu.dot_dimension_numbers<[1], [0], [0], [1], [0, 0, 1, 1], [], []>} : vector<4x4xf32>, vector<4x256xf32>, vector<4x256xf32> -> vector<4x256xf32>
    %48 = arith.addf %40, %47 : vector<4x256xf32>
    %c241_i32 = arith.constant 241 : i32
    %49 = tpu.dynamic_rotate %1 by %c241_i32 dim 1 : vector<4x256xf32>, i32 -> vector<4x256xf32>
    %c6 = arith.constant 6 : index
    %c0_38 = arith.constant 0 : index
    %50 = vector.load %arg5[%c6, %c0_38] : memref<9x256xf32, #tpu.memory_space<vmem>>, vector<1x256xf32>
    %51 = vector.broadcast %50 : vector<1x256xf32> to vector<4x256xf32>
    %52 = arith.mulf %49, %51 : vector<4x256xf32>
    %c6_39 = arith.constant 6 : index
    %c0_40 = arith.constant 0 : index
    %c0_41 = arith.constant 0 : index
    %53 = vector.load %arg2[%c6_39, %c0_40, %c0_41] : memref<9x4x4xf32, #tpu.memory_space<vmem>>, vector<1x4x4xf32>
    %54 = vector.shape_cast %53 : vector<1x4x4xf32> to vector<4x4xf32>
    %cst_42 = arith.constant dense<0.000000e+00> : vector<4x256xf32>
    %55 = tpu.matmul %54, %52, %cst_42 {dimension_numbers = #tpu.dot_dimension_numbers<[1], [0], [0], [1], [0, 0, 1, 1], [], []>} : vector<4x4xf32>, vector<4x256xf32>, vector<4x256xf32> -> vector<4x256xf32>
    %56 = arith.addf %48, %55 : vector<4x256xf32>
    %c240_i32 = arith.constant 240 : i32
    %57 = tpu.dynamic_rotate %1 by %c240_i32 dim 1 : vector<4x256xf32>, i32 -> vector<4x256xf32>
    %c7 = arith.constant 7 : index
    %c0_43 = arith.constant 0 : index
    %58 = vector.load %arg5[%c7, %c0_43] : memref<9x256xf32, #tpu.memory_space<vmem>>, vector<1x256xf32>
    %59 = vector.broadcast %58 : vector<1x256xf32> to vector<4x256xf32>
    %60 = arith.mulf %57, %59 : vector<4x256xf32>
    %c7_44 = arith.constant 7 : index
    %c0_45 = arith.constant 0 : index
    %c0_46 = arith.constant 0 : index
    %61 = vector.load %arg2[%c7_44, %c0_45, %c0_46] : memref<9x4x4xf32, #tpu.memory_space<vmem>>, vector<1x4x4xf32>
    %62 = vector.shape_cast %61 : vector<1x4x4xf32> to vector<4x4xf32>
    %cst_47 = arith.constant dense<0.000000e+00> : vector<4x256xf32>
    %63 = tpu.matmul %62, %60, %cst_47 {dimension_numbers = #tpu.dot_dimension_numbers<[1], [0], [0], [1], [0, 0, 1, 1], [], []>} : vector<4x4xf32>, vector<4x256xf32>, vector<4x256xf32> -> vector<4x256xf32>
    %64 = arith.addf %56, %63 : vector<4x256xf32>
    %c239_i32 = arith.constant 239 : i32
    %65 = tpu.dynamic_rotate %1 by %c239_i32 dim 1 : vector<4x256xf32>, i32 -> vector<4x256xf32>
    %c8 = arith.constant 8 : index
    %c0_48 = arith.constant 0 : index
    %66 = vector.load %arg5[%c8, %c0_48] : memref<9x256xf32, #tpu.memory_space<vmem>>, vector<1x256xf32>
    %67 = vector.broadcast %66 : vector<1x256xf32> to vector<4x256xf32>
    %68 = arith.mulf %65, %67 : vector<4x256xf32>
    %c8_49 = arith.constant 8 : index
    %c0_50 = arith.constant 0 : index
    %c0_51 = arith.constant 0 : index
    %69 = vector.load %arg2[%c8_49, %c0_50, %c0_51] : memref<9x4x4xf32, #tpu.memory_space<vmem>>, vector<1x4x4xf32>
    %70 = vector.shape_cast %69 : vector<1x4x4xf32> to vector<4x4xf32>
    %cst_52 = arith.constant dense<0.000000e+00> : vector<4x256xf32>
    %71 = tpu.matmul %70, %68, %cst_52 {dimension_numbers = #tpu.dot_dimension_numbers<[1], [0], [0], [1], [0, 0, 1, 1], [], []>} : vector<4x4xf32>, vector<4x256xf32>, vector<4x256xf32> -> vector<4x256xf32>
    %72 = arith.addf %64, %71 : vector<4x256xf32>
    %cst_53 = arith.constant dense<0.000000e+00> : vector<4xf32>
    %73 = vector.multi_reduction <add>, %72, %cst_53 [1] : vector<4x256xf32> to vector<4xf32>
    %74 = vector.shape_cast %73 : vector<4xf32> to vector<4x1xf32>
    %cst_54 = arith.constant 2.560000e+02 : f32
    %75 = vector.broadcast %cst_54 : f32 to vector<4x1xf32>
    %76 = arith.divf %74, %75 : vector<4x1xf32>
    %77 = vector.broadcast %76 : vector<4x1xf32> to vector<4x256xf32>
    %78 = arith.subf %72, %77 : vector<4x256xf32>
    %79 = arith.mulf %78, %78 : vector<4x256xf32>
    %cst_55 = arith.constant dense<0.000000e+00> : vector<4xf32>
    %80 = vector.multi_reduction <add>, %79, %cst_55 [1] : vector<4x256xf32> to vector<4xf32>
    %81 = vector.shape_cast %80 : vector<4xf32> to vector<4x1xf32>
    %cst_56 = arith.constant 2.560000e+02 : f32
    %82 = vector.broadcast %cst_56 : f32 to vector<4x1xf32>
    %83 = arith.divf %81, %82 : vector<4x1xf32>
    %cst_57 = arith.constant 9.99999974E-6 : f32
    %84 = vector.broadcast %cst_57 : f32 to vector<4x1xf32>
    %85 = arith.addf %83, %84 : vector<4x1xf32>
    %86 = math.rsqrt %85 : vector<4x1xf32>
    %87 = vector.broadcast %86 : vector<4x1xf32> to vector<4x256xf32>
    %88 = arith.mulf %78, %87 : vector<4x256xf32>
    %89 = vector.broadcast %2 : vector<4x1xf32> to vector<4x256xf32>
    %90 = arith.mulf %88, %89 : vector<4x256xf32>
    %91 = vector.broadcast %3 : vector<4x1xf32> to vector<4x256xf32>
    %92 = arith.addf %90, %91 : vector<4x256xf32>
    %cst_58 = arith.constant 0.000000e+00 : f32
    %93 = vector.broadcast %cst_58 : f32 to vector<4x256xf32>
    %94 = arith.maximumf %92, %93 : vector<4x256xf32>
    %c17_i32_59 = arith.constant 17 : i32
    %95 = tpu.dynamic_rotate %94 by %c17_i32_59 dim 1 : vector<4x256xf32>, i32 -> vector<4x256xf32>
    %c0_60 = arith.constant 0 : index
    %c0_61 = arith.constant 0 : index
    %96 = vector.load %arg5[%c0_60, %c0_61] : memref<9x256xf32, #tpu.memory_space<vmem>>, vector<1x256xf32>
    %97 = vector.broadcast %96 : vector<1x256xf32> to vector<4x256xf32>
    %98 = arith.mulf %95, %97 : vector<4x256xf32>
    %c0_62 = arith.constant 0 : index
    %c0_63 = arith.constant 0 : index
    %c0_64 = arith.constant 0 : index
    %99 = vector.load %arg3[%c0_62, %c0_63, %c0_64] : memref<9x4x4xf32, #tpu.memory_space<vmem>>, vector<1x4x4xf32>
    %100 = vector.shape_cast %99 : vector<1x4x4xf32> to vector<4x4xf32>
    %cst_65 = arith.constant dense<0.000000e+00> : vector<4x256xf32>
    %101 = tpu.matmul %100, %98, %cst_65 {dimension_numbers = #tpu.dot_dimension_numbers<[1], [0], [0], [1], [0, 0, 1, 1], [], []>} : vector<4x4xf32>, vector<4x256xf32>, vector<4x256xf32> -> vector<4x256xf32>
    %c16_i32_66 = arith.constant 16 : i32
    %102 = tpu.dynamic_rotate %94 by %c16_i32_66 dim 1 : vector<4x256xf32>, i32 -> vector<4x256xf32>
    %c1_67 = arith.constant 1 : index
    %c0_68 = arith.constant 0 : index
    %103 = vector.load %arg5[%c1_67, %c0_68] : memref<9x256xf32, #tpu.memory_space<vmem>>, vector<1x256xf32>
    %104 = vector.broadcast %103 : vector<1x256xf32> to vector<4x256xf32>
    %105 = arith.mulf %102, %104 : vector<4x256xf32>
    %c1_69 = arith.constant 1 : index
    %c0_70 = arith.constant 0 : index
    %c0_71 = arith.constant 0 : index
    %106 = vector.load %arg3[%c1_69, %c0_70, %c0_71] : memref<9x4x4xf32, #tpu.memory_space<vmem>>, vector<1x4x4xf32>
    %107 = vector.shape_cast %106 : vector<1x4x4xf32> to vector<4x4xf32>
    %cst_72 = arith.constant dense<0.000000e+00> : vector<4x256xf32>
    %108 = tpu.matmul %107, %105, %cst_72 {dimension_numbers = #tpu.dot_dimension_numbers<[1], [0], [0], [1], [0, 0, 1, 1], [], []>} : vector<4x4xf32>, vector<4x256xf32>, vector<4x256xf32> -> vector<4x256xf32>
    %109 = arith.addf %101, %108 : vector<4x256xf32>
    %c15_i32_73 = arith.constant 15 : i32
    %110 = tpu.dynamic_rotate %94 by %c15_i32_73 dim 1 : vector<4x256xf32>, i32 -> vector<4x256xf32>
    %c2_74 = arith.constant 2 : index
    %c0_75 = arith.constant 0 : index
    %111 = vector.load %arg5[%c2_74, %c0_75] : memref<9x256xf32, #tpu.memory_space<vmem>>, vector<1x256xf32>
    %112 = vector.broadcast %111 : vector<1x256xf32> to vector<4x256xf32>
    %113 = arith.mulf %110, %112 : vector<4x256xf32>
    %c2_76 = arith.constant 2 : index
    %c0_77 = arith.constant 0 : index
    %c0_78 = arith.constant 0 : index
    %114 = vector.load %arg3[%c2_76, %c0_77, %c0_78] : memref<9x4x4xf32, #tpu.memory_space<vmem>>, vector<1x4x4xf32>
    %115 = vector.shape_cast %114 : vector<1x4x4xf32> to vector<4x4xf32>
    %cst_79 = arith.constant dense<0.000000e+00> : vector<4x256xf32>
    %116 = tpu.matmul %115, %113, %cst_79 {dimension_numbers = #tpu.dot_dimension_numbers<[1], [0], [0], [1], [0, 0, 1, 1], [], []>} : vector<4x4xf32>, vector<4x256xf32>, vector<4x256xf32> -> vector<4x256xf32>
    %117 = arith.addf %109, %116 : vector<4x256xf32>
    %c1_i32_80 = arith.constant 1 : i32
    %118 = tpu.dynamic_rotate %94 by %c1_i32_80 dim 1 : vector<4x256xf32>, i32 -> vector<4x256xf32>
    %c3_81 = arith.constant 3 : index
    %c0_82 = arith.constant 0 : index
    %119 = vector.load %arg5[%c3_81, %c0_82] : memref<9x256xf32, #tpu.memory_space<vmem>>, vector<1x256xf32>
    %120 = vector.broadcast %119 : vector<1x256xf32> to vector<4x256xf32>
    %121 = arith.mulf %118, %120 : vector<4x256xf32>
    %c3_83 = arith.constant 3 : index
    %c0_84 = arith.constant 0 : index
    %c0_85 = arith.constant 0 : index
    %122 = vector.load %arg3[%c3_83, %c0_84, %c0_85] : memref<9x4x4xf32, #tpu.memory_space<vmem>>, vector<1x4x4xf32>
    %123 = vector.shape_cast %122 : vector<1x4x4xf32> to vector<4x4xf32>
    %cst_86 = arith.constant dense<0.000000e+00> : vector<4x256xf32>
    %124 = tpu.matmul %123, %121, %cst_86 {dimension_numbers = #tpu.dot_dimension_numbers<[1], [0], [0], [1], [0, 0, 1, 1], [], []>} : vector<4x4xf32>, vector<4x256xf32>, vector<4x256xf32> -> vector<4x256xf32>
    %125 = arith.addf %117, %124 : vector<4x256xf32>
    %c4_87 = arith.constant 4 : index
    %c0_88 = arith.constant 0 : index
    %c0_89 = arith.constant 0 : index
    %126 = vector.load %arg3[%c4_87, %c0_88, %c0_89] : memref<9x4x4xf32, #tpu.memory_space<vmem>>, vector<1x4x4xf32>
    %127 = vector.shape_cast %126 : vector<1x4x4xf32> to vector<4x4xf32>
    %cst_90 = arith.constant dense<0.000000e+00> : vector<4x256xf32>
    %128 = tpu.matmul %127, %94, %cst_90 {dimension_numbers = #tpu.dot_dimension_numbers<[1], [0], [0], [1], [0, 0, 1, 1], [], []>} : vector<4x4xf32>, vector<4x256xf32>, vector<4x256xf32> -> vector<4x256xf32>
    %129 = arith.addf %125, %128 : vector<4x256xf32>
    %c255_i32_91 = arith.constant 255 : i32
    %130 = tpu.dynamic_rotate %94 by %c255_i32_91 dim 1 : vector<4x256xf32>, i32 -> vector<4x256xf32>
    %c5_92 = arith.constant 5 : index
    %c0_93 = arith.constant 0 : index
    %131 = vector.load %arg5[%c5_92, %c0_93] : memref<9x256xf32, #tpu.memory_space<vmem>>, vector<1x256xf32>
    %132 = vector.broadcast %131 : vector<1x256xf32> to vector<4x256xf32>
    %133 = arith.mulf %130, %132 : vector<4x256xf32>
    %c5_94 = arith.constant 5 : index
    %c0_95 = arith.constant 0 : index
    %c0_96 = arith.constant 0 : index
    %134 = vector.load %arg3[%c5_94, %c0_95, %c0_96] : memref<9x4x4xf32, #tpu.memory_space<vmem>>, vector<1x4x4xf32>
    %135 = vector.shape_cast %134 : vector<1x4x4xf32> to vector<4x4xf32>
    %cst_97 = arith.constant dense<0.000000e+00> : vector<4x256xf32>
    %136 = tpu.matmul %135, %133, %cst_97 {dimension_numbers = #tpu.dot_dimension_numbers<[1], [0], [0], [1], [0, 0, 1, 1], [], []>} : vector<4x4xf32>, vector<4x256xf32>, vector<4x256xf32> -> vector<4x256xf32>
    %137 = arith.addf %129, %136 : vector<4x256xf32>
    %c241_i32_98 = arith.constant 241 : i32
    %138 = tpu.dynamic_rotate %94 by %c241_i32_98 dim 1 : vector<4x256xf32>, i32 -> vector<4x256xf32>
    %c6_99 = arith.constant 6 : index
    %c0_100 = arith.constant 0 : index
    %139 = vector.load %arg5[%c6_99, %c0_100] : memref<9x256xf32, #tpu.memory_space<vmem>>, vector<1x256xf32>
    %140 = vector.broadcast %139 : vector<1x256xf32> to vector<4x256xf32>
    %141 = arith.mulf %138, %140 : vector<4x256xf32>
    %c6_101 = arith.constant 6 : index
    %c0_102 = arith.constant 0 : index
    %c0_103 = arith.constant 0 : index
    %142 = vector.load %arg3[%c6_101, %c0_102, %c0_103] : memref<9x4x4xf32, #tpu.memory_space<vmem>>, vector<1x4x4xf32>
    %143 = vector.shape_cast %142 : vector<1x4x4xf32> to vector<4x4xf32>
    %cst_104 = arith.constant dense<0.000000e+00> : vector<4x256xf32>
    %144 = tpu.matmul %143, %141, %cst_104 {dimension_numbers = #tpu.dot_dimension_numbers<[1], [0], [0], [1], [0, 0, 1, 1], [], []>} : vector<4x4xf32>, vector<4x256xf32>, vector<4x256xf32> -> vector<4x256xf32>
    %145 = arith.addf %137, %144 : vector<4x256xf32>
    %c240_i32_105 = arith.constant 240 : i32
    %146 = tpu.dynamic_rotate %94 by %c240_i32_105 dim 1 : vector<4x256xf32>, i32 -> vector<4x256xf32>
    %c7_106 = arith.constant 7 : index
    %c0_107 = arith.constant 0 : index
    %147 = vector.load %arg5[%c7_106, %c0_107] : memref<9x256xf32, #tpu.memory_space<vmem>>, vector<1x256xf32>
    %148 = vector.broadcast %147 : vector<1x256xf32> to vector<4x256xf32>
    %149 = arith.mulf %146, %148 : vector<4x256xf32>
    %c7_108 = arith.constant 7 : index
    %c0_109 = arith.constant 0 : index
    %c0_110 = arith.constant 0 : index
    %150 = vector.load %arg3[%c7_108, %c0_109, %c0_110] : memref<9x4x4xf32, #tpu.memory_space<vmem>>, vector<1x4x4xf32>
    %151 = vector.shape_cast %150 : vector<1x4x4xf32> to vector<4x4xf32>
    %cst_111 = arith.constant dense<0.000000e+00> : vector<4x256xf32>
    %152 = tpu.matmul %151, %149, %cst_111 {dimension_numbers = #tpu.dot_dimension_numbers<[1], [0], [0], [1], [0, 0, 1, 1], [], []>} : vector<4x4xf32>, vector<4x256xf32>, vector<4x256xf32> -> vector<4x256xf32>
    %153 = arith.addf %145, %152 : vector<4x256xf32>
    %c239_i32_112 = arith.constant 239 : i32
    %154 = tpu.dynamic_rotate %94 by %c239_i32_112 dim 1 : vector<4x256xf32>, i32 -> vector<4x256xf32>
    %c8_113 = arith.constant 8 : index
    %c0_114 = arith.constant 0 : index
    %155 = vector.load %arg5[%c8_113, %c0_114] : memref<9x256xf32, #tpu.memory_space<vmem>>, vector<1x256xf32>
    %156 = vector.broadcast %155 : vector<1x256xf32> to vector<4x256xf32>
    %157 = arith.mulf %154, %156 : vector<4x256xf32>
    %c8_115 = arith.constant 8 : index
    %c0_116 = arith.constant 0 : index
    %c0_117 = arith.constant 0 : index
    %158 = vector.load %arg3[%c8_115, %c0_116, %c0_117] : memref<9x4x4xf32, #tpu.memory_space<vmem>>, vector<1x4x4xf32>
    %159 = vector.shape_cast %158 : vector<1x4x4xf32> to vector<4x4xf32>
    %cst_118 = arith.constant dense<0.000000e+00> : vector<4x256xf32>
    %160 = tpu.matmul %159, %157, %cst_118 {dimension_numbers = #tpu.dot_dimension_numbers<[1], [0], [0], [1], [0, 0, 1, 1], [], []>} : vector<4x4xf32>, vector<4x256xf32>, vector<4x256xf32> -> vector<4x256xf32>
    %161 = arith.addf %153, %160 : vector<4x256xf32>
    %cst_119 = arith.constant dense<0.000000e+00> : vector<4xf32>
    %162 = vector.multi_reduction <add>, %161, %cst_119 [1] : vector<4x256xf32> to vector<4xf32>
    %163 = vector.shape_cast %162 : vector<4xf32> to vector<4x1xf32>
    %cst_120 = arith.constant 2.560000e+02 : f32
    %164 = vector.broadcast %cst_120 : f32 to vector<4x1xf32>
    %165 = arith.divf %163, %164 : vector<4x1xf32>
    %166 = vector.broadcast %165 : vector<4x1xf32> to vector<4x256xf32>
    %167 = arith.subf %161, %166 : vector<4x256xf32>
    %168 = arith.mulf %167, %167 : vector<4x256xf32>
    %cst_121 = arith.constant dense<0.000000e+00> : vector<4xf32>
    %169 = vector.multi_reduction <add>, %168, %cst_121 [1] : vector<4x256xf32> to vector<4xf32>
    %170 = vector.shape_cast %169 : vector<4xf32> to vector<4x1xf32>
    %cst_122 = arith.constant 2.560000e+02 : f32
    %171 = vector.broadcast %cst_122 : f32 to vector<4x1xf32>
    %172 = arith.divf %170, %171 : vector<4x1xf32>
    %cst_123 = arith.constant 9.99999974E-6 : f32
    %173 = vector.broadcast %cst_123 : f32 to vector<4x1xf32>
    %174 = arith.addf %172, %173 : vector<4x1xf32>
    %175 = math.rsqrt %174 : vector<4x1xf32>
    %176 = vector.broadcast %175 : vector<4x1xf32> to vector<4x256xf32>
    %177 = arith.mulf %167, %176 : vector<4x256xf32>
    %178 = vector.broadcast %4 : vector<4x1xf32> to vector<4x256xf32>
    %179 = arith.mulf %177, %178 : vector<4x256xf32>
    %180 = vector.broadcast %5 : vector<4x1xf32> to vector<4x256xf32>
    %181 = arith.addf %179, %180 : vector<4x256xf32>
    %182 = arith.addf %1, %181 : vector<4x256xf32>
    %cst_124 = arith.constant 0.000000e+00 : f32
    %183 = vector.broadcast %cst_124 : f32 to vector<4x256xf32>
    %184 = arith.maximumf %182, %183 : vector<4x256xf32>
    %c0_125 = arith.constant 0 : index
    %c0_126 = arith.constant 0 : index
    %c0_127 = arith.constant 0 : index
    %185 = vector.load %arg6[%c0_125, %c0_126, %c0_127] : memref<1x4x256xf32, #tpu.memory_space<vmem>>, vector<1x4x256xf32>
    %186 = vector.shape_cast %185 : vector<1x4x256xf32> to vector<4x256xf32>
    %187 = vector.shape_cast %184 : vector<4x256xf32> to vector<1x4x256xf32>
    tpu.vector_store %arg6[%c0_125, %c0_126, %c0_127], %187 {strides = array<i32>} : memref<1x4x256xf32, #tpu.memory_space<vmem>>, vector<1x4x256xf32>,
    return
  }
  func.func @transform_0(%arg0: i32) -> (i32, i32, i32) {
    %c0_i32 = arith.constant 0 : i32
    %c0_i32_0 = arith.constant 0 : i32
    %c0_i32_1 = arith.constant 0 : i32
    return %arg0, %c0_i32, %c0_i32_0 : i32, i32, i32
  }
  func.func @transform_1(%arg0: i32) -> (i32, i32, i32) {
    %c0_i32 = arith.constant 0 : i32
    %c0_i32_0 = arith.constant 0 : i32
    %c0_i32_1 = arith.constant 0 : i32
    %c0_i32_2 = arith.constant 0 : i32
    return %c0_i32, %c0_i32_0, %c0_i32_1 : i32, i32, i32
  }
  func.func @transform_2(%arg0: i32) -> (i32, i32, i32) {
    %c0_i32 = arith.constant 0 : i32
    %c0_i32_0 = arith.constant 0 : i32
    %c0_i32_1 = arith.constant 0 : i32
    %c0_i32_2 = arith.constant 0 : i32
    return %c0_i32, %c0_i32_0, %c0_i32_1 : i32, i32, i32
  }
  func.func @transform_3(%arg0: i32) -> (i32, i32) {
    %c0_i32 = arith.constant 0 : i32
    %c0_i32_0 = arith.constant 0 : i32
    %c0_i32_1 = arith.constant 0 : i32
    return %c0_i32, %c0_i32_0 : i32, i32
  }
  func.func @transform_4(%arg0: i32) -> (i32, i32) {
    %c0_i32 = arith.constant 0 : i32
    %c0_i32_0 = arith.constant 0 : i32
    %c0_i32_1 = arith.constant 0 : i32
    return %c0_i32, %c0_i32_0 : i32, i32
  }
  func.func @transform_5(%arg0: i32) -> (i32, i32, i32) {
    %c0_i32 = arith.constant 0 : i32
    %c0_i32_0 = arith.constant 0 : i32
    %c0_i32_1 = arith.constant 0 : i32
    return %arg0, %c0_i32, %c0_i32_0 : i32, i32, i32
  }
}

</mosaic_0001>

<llo_original>
// kernel: residual_block.1
$region0: #{residual_block.1}
  #allocation0 [shape = 'u32[]', space=smem, size = 0x4, offset = 0x4, fixed_abs, tag = 'smem constant byte address 0x4 - core index']
  #allocation1 [shape = 'u32[144,128]{1,0:T(1,128)}', space=vmem, size = 0x12000, scoped, tag = 'internal scratch']
  %s0 = inlined_call_operand.vmem [shape: f32[2,4,256], index: 0, kind: input, shape index: {}]
  %s1 = inlined_call_operand.vmem [shape: f32[9,4,4], index: 1, kind: input, shape index: {}]
  %s2 = inlined_call_operand.vmem [shape: f32[9,4,4], index: 2, kind: input, shape index: {}]
  %s3 = inlined_call_operand.vmem [shape: f32[4,4], index: 3, kind: input, shape index: {}]
  %s4 = inlined_call_operand.vmem [shape: f32[9,256], index: 4, kind: input, shape index: {}]
  %s5 = inlined_call_operand.vmem [shape: f32[2,4,256], index: 5, kind: output, shape index: {}]
  %s6 = sld [smem:[#allocation0]]
  $region53: #{residual_block.1} parent=0
    _
  %s8 = ssub.s32 1, %s6
  %s9 = scalar_select 0, %s8, %s6
  loop: start=0, step=1, limit=4
  $region2: #{residual_block.1} parent=0 // loop_pre_header
    _
  $region3: #{residual_block.1} parent=0 // loop_header
    %s11 = sphi 0, %s15
    %p12 = scmp.ge.s32.totalorder %s11, 4
    %s21 = sphi 0, %s23
    %s24 = sphi 0, %s21
    %s25 = sphi 0, %s24
    %s41 = sphi 0, %s25
    %s45 = sphi 0, %s45
    %s47 = sphi 0, %s45
    %s48 = sphi 0, %s47
    %s62 = sphi 0, %s48
    %s66 = sphi 0, %s66
    %s68 = sphi 0, %s66
    %s69 = sphi 0, %s68
    %s83 = sphi 0, %s69
    %s87 = sphi 0, %s87
    %s89 = sphi 0, %s87
    %s90 = sphi 0, %s89
    %s104 = sphi 0, %s90
    %s108 = sphi 0, %s108
    %s110 = sphi 0, %s108
    %s111 = sphi 0, %s110
    %s125 = sphi 0, %s111
    %s131 = sphi 0, %s133
    %s134 = sphi 0, %s131
    %s135 = sphi 0, %s134
    %s151 = sphi 0, %s135
  $region4: #{residual_block.1} parent=0 // loop_header_branch
    %14 = sbr.rel (%p12) target = $region8
  $region5: #{residual_block.1} parent=0 // loop_body
    %s16 = ssub.s32 %s11, 1
    %s17 = ssub.s32 %s11, 2
    %s18 = sadd.s32 %s11, 1
    %s19 = ssub.s32 %s11, %s18
    %p20 = scmp.eq.s32.totalorder %s19, 0
    %s22 = sadd.s32 %s21, 1
    %s23 = scalar_select %p20, %s21, %s22
    %p26 = pneg %p20
    %p27 = scmp.eq.s32.totalorder %s11, 1
    %p28 = por %p26, %p27
    %p29 = scmp.ne.s32.totalorder %s21, %s24
    %p30 = scmp.eq.s32.totalorder %s11, 0
    %p31 = por %p29, %p30
    %p32 = scmp.ne.s32.totalorder %s21, %s24
    %p33 = scmp.eq.s32.totalorder %s16, 1
    %p34 = por %p32, %p33
    %p35 = scmp.ne.s32.totalorder %s24, %s25
    %p36 = scmp.eq.s32.totalorder %s16, 0
    %p37 = por %p35, %p36
    %p38 = scmp.ne.s32.totalorder %s24, %s25
    %p39 = scmp.eq.s32.totalorder %s17, 1
    %p40 = por %p38, %p39
    %p42 = scmp.ne.s32.totalorder %s25, %s41
    %p43 = scmp.eq.s32.totalorder %s17, 0
    %p44 = por %p42, %p43
    %s46 = sadd.s32 %s45, 1
    %p49 = scmp.eq.s32.totalorder %s11, 1
    %p50 = scmp.ne.s32.totalorder %s45, %s47
    %p51 = scmp.eq.s32.totalorder %s11, 0
    %p52 = por %p50, %p51
    %p53 = scmp.ne.s32.totalorder %s45, %s47
    %p54 = scmp.eq.s32.totalorder %s16, 1
    %p55 = por %p53, %p54
    %p56 = scmp.ne.s32.totalorder %s47, %s48
    %p57 = scmp.eq.s32.totalorder %s16, 0
    %p58 = por %p56, %p57
    %p59 = scmp.ne.s32.totalorder %s47, %s48
    %p60 = scmp.eq.s32.totalorder %s17, 1
    %p61 = por %p59, %p60
    %p63 = scmp.ne.s32.totalorder %s48, %s62
    %p64 = scmp.eq.s32.totalorder %s17, 0
    %p65 = por %p63, %p64
    %s67 = sadd.s32 %s66, 1
    %p70 = scmp.eq.s32.totalorder %s11, 1
    %p71 = scmp.ne.s32.totalorder %s66, %s68
    %p72 = scmp.eq.s32.totalorder %s11, 0
    %p73 = por %p71, %p72
    %p74 = scmp.ne.s32.totalorder %s66, %s68
    %p75 = scmp.eq.s32.totalorder %s16, 1
    %p76 = por %p74, %p75
    %p77 = scmp.ne.s32.totalorder %s68, %s69
    %p78 = scmp.eq.s32.totalorder %s16, 0
    %p79 = por %p77, %p78
    %p80 = scmp.ne.s32.totalorder %s68, %s69
    %p81 = scmp.eq.s32.totalorder %s17, 1
    %p82 = por %p80, %p81
    %p84 = scmp.ne.s32.totalorder %s69, %s83
    %p85 = scmp.eq.s32.totalorder %s17, 0
    %p86 = por %p84, %p85
    %s88 = sadd.s32 %s87, 1
    %p91 = scmp.eq.s32.totalorder %s11, 1
    %p92 = scmp.ne.s32.totalorder %s87, %s89
    %p93 = scmp.eq.s32.totalorder %s11, 0
    %p94 = por %p92, %p93
    %p95 = scmp.ne.s32.totalorder %s87, %s89
    %p96 = scmp.eq.s32.totalorder %s16, 1
    %p97 = por %p95, %p96
    %p98 = scmp.ne.s32.totalorder %s89, %s90
    %p99 = scmp.eq.s32.totalorder %s16, 0
    %p100 = por %p98, %p99
    %p101 = scmp.ne.s32.totalorder %s89, %s90
    %p102 = scmp.eq.s32.totalorder %s17, 1
    %p103 = por %p101, %p102
    %p105 = scmp.ne.s32.totalorder %s90, %s104
    %p106 = scmp.eq.s32.totalorder %s17, 0
    %p107 = por %p105, %p106
    %s109 = sadd.s32 %s108, 1
    %p112 = scmp.eq.s32.totalorder %s11, 1
    %p113 = scmp.ne.s32.totalorder %s108, %s110
    %p114 = scmp.eq.s32.totalorder %s11, 0
    %p115 = por %p113, %p114
    %p116 = scmp.ne.s32.totalorder %s108, %s110
    %p117 = scmp.eq.s32.totalorder %s16, 1
    %p118 = por %p116, %p117
    %p119 = scmp.ne.s32.totalorder %s110, %s111
    %p120 = scmp.eq.s32.totalorder %s16, 0
    %p121 = por %p119, %p120
    %p122 = scmp.ne.s32.totalorder %s110, %s111
    %p123 = scmp.eq.s32.totalorder %s17, 1
    %p124 = por %p122, %p123
    %p126 = scmp.ne.s32.totalorder %s111, %s125
    %p127 = scmp.eq.s32.totalorder %s17, 0
    %p128 = por %p126, %p127
    %s129 = ssub.s32 %s11, %s18
    %p130 = scmp.eq.s32.totalorder %s129, 0
    %s132 = sadd.s32 %s131, 1
    %s133 = scalar_select %p130, %s131, %s132
    %p136 = pneg %p130
    %p137 = scmp.eq.s32.totalorder %s11, 1
    %p138 = por %p136, %p137
    %p139 = scmp.ne.s32.totalorder %s131, %s134
    %p140 = scmp.eq.s32.totalorder %s11, 0
    %p141 = por %p139, %p140
    %p142 = scmp.ne.s32.totalorder %s131, %s134
    %p143 = scmp.eq.s32.totalorder %s16, 1
    %p144 = por %p142, %p143
    %p145 = scmp.ne.s32.totalorder %s134, %s135
    %p146 = scmp.eq.s32.totalorder %s16, 0
    %p147 = por %p145, %p146
    %p148 = scmp.ne.s32.totalorder %s134, %s135
    %p149 = scmp.eq.s32.totalorder %s17, 1
    %p150 = por %p148, %p149
    %p152 = scmp.ne.s32.totalorder %s135, %s151
    %p153 = scmp.eq.s32.totalorder %s17, 0
    %p154 = por %p152, %p153
    %p155 = scmp.le.s32.totalorder 1, %s11
    %p156 = scmp.lt.s32.totalorder %s11, 3
    %p157 = pnand %p155, %p156
    %p158 = pneg %p157
    // Predicated region
    $region9: #{residual_block.1} parent=5 // pred_check
      _
    $region10: #{residual_block.1} parent=5 // pred_check_branch
      %160 = sbr.rel (%p157) target = $region12
    $region11: #{residual_block.1} parent=5 // pred_region
      %s161 = ssub.s32 %s11, 1
      // Predicated region
      $region13: #{residual_block.1} parent=11 // pred_check
        %p162 = pneg %p58
      $region14: #{residual_block.1} parent=11 // pred_check_branch
        %164 = sbr.rel (%p162) target = $region16
      $region15: #{residual_block.1} parent=11 // pred_region
        _
      $region16: #{residual_block.1} parent=11 // pred_fallthru
        _
      // Predicated region
      $region17: #{residual_block.1} parent=11 // pred_check
        %p165 = pneg %p79
      $region18: #{residual_block.1} parent=11 // pred_check_branch
        %167 = sbr.rel (%p165) target = $region20
      $region19: #{residual_block.1} parent=11 // pred_region
        _
      $region20: #{residual_block.1} parent=11 // pred_fallthru
        _
      // Predicated region
      $region21: #{residual_block.1} parent=11 // pred_check
        %p168 = pneg %p100
      $region22: #{residual_block.1} parent=11 // pred_check_branch
        %170 = sbr.rel (%p168) target = $region24
      $region23: #{residual_block.1} parent=11 // pred_region
        _
      $region24: #{residual_block.1} parent=11 // pred_fallthru
        _
      // Predicated region
      $region25: #{residual_block.1} parent=11 // pred_check
        %p171 = pneg %p121
      $region26: #{residual_block.1} parent=11 // pred_check_branch
        %173 = sbr.rel (%p171) target = $region28
      $region27: #{residual_block.1} parent=11 // pred_region
        _
      $region28: #{residual_block.1} parent=11 // pred_fallthru
        _
    $region12: #{residual_block.1} parent=5 // pred_fallthru
      _
    %p174 = scmp.lt.s32.totalorder %s11, 2
    // Predicated region
    $region29: #{residual_block.1} parent=5 // pred_check
      %p175 = pneg %p174
    $region30: #{residual_block.1} parent=5 // pred_check_branch
      %177 = sbr.rel (%p175) target = $region32
    $region31: #{residual_block.1} parent=5 // pred_region
      // Predicated region
      $region33: #{residual_block.1} parent=31 // pred_check
        %p178 = pneg %p31
      $region34: #{residual_block.1} parent=31 // pred_check_branch
        %180 = sbr.rel (%p178) target = $region36
      $region35: #{residual_block.1} parent=31 // pred_region
        %p181 = scmp.lt.s32.totalorder %s11, 1
        %s182 = scalar_select %p181, %s11, 1
        %s183 = smul.addr %s182, 2
        %s184 = smul.addr %s183, 4
        %s185 = scalar_lea.vmem %s0, %s184
      $region36: #{residual_block.1} parent=31 // pred_fallthru
        _
    $region32: #{residual_block.1} parent=5 // pred_fallthru
      _
    %p186 = scmp.le.s32.totalorder 1, %s11
    %p187 = scmp.lt.s32.totalorder %s11, 3
    %p188 = pnand %p186, %p187
    %p189 = pneg %p188
    // Predicated region
    $region37: #{residual_block.1} parent=5 // pred_check
      _
    $region38: #{residual_block.1} parent=5 // pred_check_branch
      %191 = sbr.rel (%p188) target = $region40
    $region39: #{residual_block.1} parent=5 // pred_region
      %s192 = ssub.s32 %s11, 1
      %p193 = scmp.lt.s32.totalorder %s16, 1
      %s194 = scalar_select %p193, %s16, 1
      %s195 = smul.addr %s194, 2
      %s196 = smul.addr %s195, 4
      %s197 = scalar_lea.vmem %s0, %s196
      %p198 = pneg %p37
      %p199 = pneg %p34
      %p200 = pneg %p58
      %p201 = pneg %p55
      %p202 = pneg %p79
      %p203 = pneg %p76
      %p204 = pneg %p100
      %p205 = pneg %p97
      %p206 = pneg %p121
      %p207 = pneg %p118
      %p208 = pneg %p147
      %p209 = pneg %p144
      %p210 = scmp.lt.s32.totalorder %s16, 1
      %s211 = scalar_select %p210, %s16, 1
      %s212 = smul.addr %s211, 2
      %s213 = smul.addr %s212, 4
      %s214 = scalar_lea.vmem %s5, %s213
      %p215 = scmp.lt.s32.totalorder %s16, 1
      %s216 = scalar_select %p215, %s16, 1
      %s217 = smul.addr %s216, 2
      %s218 = smul.addr %s217, 4
      %s219 = scalar_lea.vmem %s0, %s218
      %p220 = scmp.lt.s32.totalorder %s16, 1
      %s221 = scalar_select %p220, %s16, 1
      %s222 = smul.addr %s221, 2
      %s223 = smul.addr %s222, 4
      %s224 = scalar_lea.vmem %s5, %s223
      %v225 = vld [vmem:[%s219] sm:$0xff]
      %v226 = vld [vmem:[%s3] sm:$0xf]
      %v228 = vcombine.high %v225, %v225
      %230 = vrot.lane.b32.xlu0 %v225, 17
      %v231 = vpop.permute.xlu0 %230
      %232 = vrot.lane.b32.xlu0 %v228, 17
      %v233 = vpop.permute.xlu0 %232
      %v234 = vlaneseq
      %v235 = vand.u32 %v234, 127
      %vm236 = vcmp.lt.s32.totalorder %v235, 17
      %v237 = vsel %vm236, %v231, %v233
      %v238 = vsel %vm236, %v233, %v231
      %v239 = vld [vmem:[%s4] ss:$8 sm:$0x3]
      %v241 = vlaneseq
      %v242 = vshrl.u32 %v241, 7
      %v243 = vsub.s32 0, %v242
      %v244 = vrot.slane %v239, %v243
      %v245 = vlaneseq
      %v246 = vshrl.u32 %v245, 7
      %v247 = vsub.s32 1, %v246
      %v248 = vrot.slane %v239, %v247
      %v251 = vmul.f32 %v238, %v244
      %v252 = vmul.f32 %v237, %v248
      %v253 = vld [vmem:[%s1] sm:$0xf]
      %254 = vrot.lane.b32.xlu0 %v225, 16
      %v255 = vpop.permute.xlu0 %254
      %256 = vrot.lane.b32.xlu0 %v228, 16
      %v257 = vpop.permute.xlu0 %256
      %vm258 = vcmp.lt.s32.totalorder %v235, 16
      %v259 = vsel %vm258, %v255, %v257
      %v260 = vsel %vm258, %v257, %v255
      %s261 = scalar_lea.vmem %s4, 1
      %v262 = vld [vmem:[%s261] ss:$8 sm:$0x3]
      %v264 = vlaneseq
      %v265 = vshrl.u32 %v264, 7
      %v266 = vsub.s32 0, %v265
      %v267 = vrot.slane %v262, %v266
      %v268 = vlaneseq
      %v269 = vshrl.u32 %v268, 7
      %v270 = vsub.s32 1, %v269
      %v271 = vrot.slane %v262, %v270
      %v274 = vmul.f32 %v260, %v267
      %v275 = vmul.f32 %v259, %v271
      %s276 = scalar_lea.vmem %s1, 4
      %v277 = vld [vmem:[%s276] sm:$0xf]
      %vm278 = vcmask 31744
      %v280 = vsel %vm278, %v277, 0
      %vm282 = vcmask 1043456
      %v284 = vsel %vm282, %v274, 0
      %v287 = vsel %vm282, %v275, 0
      %289 = vmatprep.subr.mxu0 %v287
      %290 = vmatpush1.msra.mxu0 %v284
      %291 = vmatprep.subr.mxu0 0.0
      %292 = vmatpush1.msra.mxu0 0.0
      %293 = vmatprep.subr.mxu0 0.0
      %294 = vmatpush1.msra.mxu0 0.0
      %295 = vmatprep.subr.mxu0 0.0
      %296 = vmatpush1.msra.mxu0 0.0
      %297 = vmatprep.subr.mxu0 0.0
      %298 = vmatpush1.msra.mxu0 0.0
      %299 = vmatprep.subr.mxu0 0.0
      %300 = vmatpush1.msra.mxu0 0.0
      %301 = vmatprep.subr.mxu0 0.0
      %302 = vmatpush1.msra.mxu0 0.0
      %303 = vmatprep.subr.mxu0 0.0
      %304 = vmatpush1.msra.mxu0 0.0
      %305 = vmatprep.subr.mxu0 0.0
      %306 = vmatpush1.msra.mxu0 0.0
      %307 = vmatprep.subr.mxu0 0.0
      %308 = vmatpush1.msra.mxu0 0.0
      %309 = vmatprep.subr.mxu0 0.0
      %310 = vmatpush1.msra.mxu0 0.0
      %311 = vmatprep.subr.mxu0 0.0
      %312 = vmatpush1.msra.mxu0 0.0
      %313 = vmatprep.subr.mxu0 0.0
      %314 = vmatpush1.msra.mxu0 0.0
      %315 = vmatprep.subr.mxu0 0.0
      %316 = vmatpush1.msra.mxu0 0.0
      %317 = vmatprep.subr.mxu0 0.0
      %318 = vmatpush1.msra.mxu0 0.0
      %319 = vmatprep.subr.mxu0 0.0
      %320 = vmatpush1.msra.mxu0 0.0
      %321 = vmatprep.subr.mxu0 0.0
      %322 = vmatpush1.msra.mxu0 0.0
      %323 = vmatprep.subr.mxu0 0.0
      %324 = vmatpush1.msra.mxu0 0.0
      %325 = vmatprep.subr.mxu0 0.0
      %326 = vmatpush1.msra.mxu0 0.0
      %327 = vmatprep.subr.mxu0 0.0
      %328 = vmatpush1.msra.mxu0 0.0
      %329 = vmatprep.subr.mxu0 0.0
      %330 = vmatpush1.msra.mxu0 0.0
      %331 = vmatprep.subr.mxu0 0.0
      %332 = vmatpush1.msra.mxu0 0.0
      %333 = vmatprep.subr.mxu0 0.0
      %334 = vmatpush1.msra.mxu0 0.0
      %335 = vmatprep.subr.mxu0 0.0
      %336 = vmatpush1.msra.mxu0 0.0
      %337 = vmatprep.subr.mxu0 0.0
      %338 = vmatpush1.msra.mxu0 0.0
      %339 = vmatprep.subr.mxu0 0.0
      %340 = vmatpush1.msra.mxu0 0.0
      %341 = vmatprep.subr.mxu0 0.0
      %342 = vmatpush1.msra.mxu0 0.0
      %343 = vmatprep.subr.mxu0 0.0
      %344 = vmatpush1.msra.mxu0 0.0
      %345 = vmatprep.subr.mxu0 0.0
      %346 = vmatpush1.msra.mxu0 0.0
      %347 = vmatprep.subr.mxu0 0.0
      %348 = vmatpush1.msra.mxu0 0.0
      %349 = vmatprep.subr.mxu0 0.0
      %350 = vmatpush1.msra.mxu0 0.0
      %351 = vmatprep.subr.mxu0 0.0
      %352 = vmatpush1.msra.mxu0 0.0
      %353 = vmatprep.mubr.f32.mxu0 0.0
      %354 = vmatmul.mubr.f32.gmra.mrb[0].mxu0 %v280
      %v355 = vpop.f32.mrb[0].mxu0
      %v356 = vadd.f32 0.0, %v355
      %v357 = vpop.f32.mrb[0].mxu0
      %v358 = vadd.f32 0.0, %v357
      %359 = vdwg.mxu0
      %v361 = vsel %vm278, %v253, 0
      %v364 = vsel %vm282, %v251, 0
      %v367 = vsel %vm282, %v252, 0
      %369 = vmatprep.subr.mxu0 %v367
      %370 = vmatpush1.msra.mxu0 %v364
      %371 = vmatprep.subr.mxu0 0.0
      %372 = vmatpush1.msra.mxu0 0.0
      %373 = vmatprep.subr.mxu0 0.0
      %374 = vmatpush1.msra.mxu0 0.0
      %375 = vmatprep.subr.mxu0 0.0
      %376 = vmatpush1.msra.mxu0 0.0
      %377 = vmatprep.subr.mxu0 0.0
      %378 = vmatpush1.msra.mxu0 0.0
      %379 = vmatprep.subr.mxu0 0.0
      %380 = vmatpush1.msra.mxu0 0.0
      %381 = vmatprep.subr.mxu0 0.0
      %382 = vmatpush1.msra.mxu0 0.0
      %383 = vmatprep.subr.mxu0 0.0
      %384 = vmatpush1.msra.mxu0 0.0
      %385 = vmatprep.subr.mxu0 0.0
      %386 = vmatpush1.msra.mxu0 0.0
      %387 = vmatprep.subr.mxu0 0.0
      %388 = vmatpush1.msra.mxu0 0.0
      %389 = vmatprep.subr.mxu0 0.0
      %390 = vmatpush1.msra.mxu0 0.0
      %391 = vmatprep.subr.mxu0 0.0
      %392 = vmatpush1.msra.mxu0 0.0
      %393 = vmatprep.subr.mxu0 0.0
      %394 = vmatpush1.msra.mxu0 0.0
      %395 = vmatprep.subr.mxu0 0.0
      %396 = vmatpush1.msra.mxu0 0.0
      %397 = vmatprep.subr.mxu0 0.0
      %398 = vmatpush1.msra.mxu0 0.0
      %399 = vmatprep.subr.mxu0 0.0
      %400 = vmatpush1.msra.mxu0 0.0
      %401 = vmatprep.subr.mxu0 0.0
      %402 = vmatpush1.msra.mxu0 0.0
      %403 = vmatprep.subr.mxu0 0.0
      %404 = vmatpush1.msra.mxu0 0.0
      %405 = vmatprep.subr.mxu0 0.0
      %406 = vmatpush1.msra.mxu0 0.0
      %407 = vmatprep.subr.mxu0 0.0
      %408 = vmatpush1.msra.mxu0 0.0
      %409 = vmatprep.subr.mxu0 0.0
      %410 = vmatpush1.msra.mxu0 0.0
      %411 = vmatprep.subr.mxu0 0.0
      %412 = vmatpush1.msra.mxu0 0.0
      %413 = vmatprep.subr.mxu0 0.0
      %414 = vmatpush1.msra.mxu0 0.0
      %415 = vmatprep.subr.mxu0 0.0
      %416 = vmatpush1.msra.mxu0 0.0
      %417 = vmatprep.subr.mxu0 0.0
      %418 = vmatpush1.msra.mxu0 0.0
      %419 = vmatprep.subr.mxu0 0.0
      %420 = vmatpush1.msra.mxu0 0.0
      %421 = vmatprep.subr.mxu0 0.0
      %422 = vmatpush1.msra.mxu0 0.0
      %423 = vmatprep.subr.mxu0 0.0
      %424 = vmatpush1.msra.mxu0 0.0
      %425 = vmatprep.subr.mxu0 0.0
      %426 = vmatpush1.msra.mxu0 0.0
      %427 = vmatprep.subr.mxu0 0.0
      %428 = vmatpush1.msra.mxu0 0.0
      %429 = vmatprep.subr.mxu0 0.0
      %430 = vmatpush1.msra.mxu0 0.0
      %431 = vmatprep.subr.mxu0 0.0
      %432 = vmatpush1.msra.mxu0 0.0
      %433 = vmatprep.mubr.f32.mxu0 0.0
      %434 = vmatmul.mubr.f32.gmra.mrb[0].mxu0 %v361
      %v435 = vpop.f32.mrb[0].mxu0
      %v436 = vadd.f32 %v356, %v435
      %v437 = vpop.f32.mrb[0].mxu0
      %v438 = vadd.f32 %v358, %v437
      %439 = vdwg.mxu0
      %440 = vrot.lane.b32.xlu0 %v225, 15
      %v441 = vpop.permute.xlu0 %440
      %442 = vrot.lane.b32.xlu0 %v228, 15
      %v443 = vpop.permute.xlu0 %442
      %vm444 = vcmp.lt.s32.totalorder %v235, 15
      %v445 = vsel %vm444, %v441, %v443
      %v446 = vsel %vm444, %v443, %v441
      %s447 = scalar_lea.vmem %s4, 2
      %v448 = vld [vmem:[%s447] ss:$8 sm:$0x3]
      %v450 = vlaneseq
      %v451 = vshrl.u32 %v450, 7
      %v452 = vsub.s32 0, %v451
      %v453 = vrot.slane %v448, %v452
      %v454 = vlaneseq
      %v455 = vshrl.u32 %v454, 7
      %v456 = vsub.s32 1, %v455
      %v457 = vrot.slane %v448, %v456
      %v460 = vmul.f32 %v446, %v453
      %v461 = vmul.f32 %v445, %v457
      %s462 = scalar_lea.vmem %s1, 8
      %v463 = vld [vmem:[%s462] sm:$0xf]
      %v465 = vsel %vm278, %v463, 0
      %v468 = vsel %vm282, %v460, 0
      %v471 = vsel %vm282, %v461, 0
      %473 = vmatprep.subr.mxu0 %v471
      %474 = vmatpush1.msra.mxu0 %v468
      %475 = vmatprep.subr.mxu0 0.0
      %476 = vmatpush1.msra.mxu0 0.0
      %477 = vmatprep.subr.mxu0 0.0
      %478 = vmatpush1.msra.mxu0 0.0
      %479 = vmatprep.subr.mxu0 0.0
      %480 = vmatpush1.msra.mxu0 0.0
      %481 = vmatprep.subr.mxu0 0.0
      %482 = vmatpush1.msra.mxu0 0.0
      %483 = vmatprep.subr.mxu0 0.0
      %484 = vmatpush1.msra.mxu0 0.0
      %485 = vmatprep.subr.mxu0 0.0
      %486 = vmatpush1.msra.mxu0 0.0
      %487 = vmatprep.subr.mxu0 0.0
      %488 = vmatpush1.msra.mxu0 0.0
      %489 = vmatprep.subr.mxu0 0.0
      %490 = vmatpush1.msra.mxu0 0.0
      %491 = vmatprep.subr.mxu0 0.0
      %492 = vmatpush1.msra.mxu0 0.0
      %493 = vmatprep.subr.mxu0 0.0
      %494 = vmatpush1.msra.mxu0 0.0
      %495 = vmatprep.subr.mxu0 0.0
      %496 = vmatpush1.msra.mxu0 0.0
      %497 = vmatprep.subr.mxu0 0.0
      %498 = vmatpush1.msra.mxu0 0.0
      %499 = vmatprep.subr.mxu0 0.0
      %500 = vmatpush1.msra.mxu0 0.0
      %501 = vmatprep.subr.mxu0 0.0
      %502 = vmatpush1.msra.mxu0 0.0
      %503 = vmatprep.subr.mxu0 0.0
      %504 = vmatpush1.msra.mxu0 0.0
      %505 = vmatprep.subr.mxu0 0.0
      %506 = vmatpush1.msra.mxu0 0.0
      %507 = vmatprep.subr.mxu0 0.0
      %508 = vmatpush1.msra.mxu0 0.0
      %509 = vmatprep.subr.mxu0 0.0
      %510 = vmatpush1.msra.mxu0 0.0
      %511 = vmatprep.subr.mxu0 0.0
      %512 = vmatpush1.msra.mxu0 0.0
      %513 = vmatprep.subr.mxu0 0.0
      %514 = vmatpush1.msra.mxu0 0.0
      %515 = vmatprep.subr.mxu0 0.0
      %516 = vmatpush1.msra.mxu0 0.0
      %517 = vmatprep.subr.mxu0 0.0
      %518 = vmatpush1.msra.mxu0 0.0
      %519 = vmatprep.subr.mxu0 0.0
      %520 = vmatpush1.msra.mxu0 0.0
      %521 = vmatprep.subr.mxu0 0.0
      %522 = vmatpush1.msra.mxu0 0.0
      %523 = vmatprep.subr.mxu0 0.0
      %524 = vmatpush1.msra.mxu0 0.0
      %525 = vmatprep.subr.mxu0 0.0
      %526 = vmatpush1.msra.mxu0 0.0
      %527 = vmatprep.subr.mxu0 0.0
      %528 = vmatpush1.msra.mxu0 0.0
      %529 = vmatprep.subr.mxu0 0.0
      %530 = vmatpush1.msra.mxu0 0.0
      %531 = vmatprep.subr.mxu0 0.0
      %532 = vmatpush1.msra.mxu0 0.0
      %533 = vmatprep.subr.mxu0 0.0
      %534 = vmatpush1.msra.mxu0 0.0
      %535 = vmatprep.subr.mxu0 0.0
      %536 = vmatpush1.msra.mxu0 0.0
      %537 = vmatprep.mubr.f32.mxu0 0.0
      %538 = vmatmul.mubr.f32.gmra.mrb[0].mxu0 %v465
      %v539 = vpop.f32.mrb[0].mxu0
      %v540 = vadd.f32 0.0, %v539
      %v541 = vpop.f32.mrb[0].mxu0
      %v542 = vadd.f32 0.0, %v541
      %543 = vdwg.mxu0
      %v544 = vadd.f32 %v436, %v540
      %v545 = vadd.f32 %v438, %v542
      %546 = vrot.lane.b32.xlu0 %v225, 1
      %v547 = vpop.permute.xlu0 %546
      %548 = vrot.lane.b32.xlu0 %v228, 1
      %v549 = vpop.permute.xlu0 %548
      %vm550 = vcmp.lt.s32.totalorder %v235, 1
      %v551 = vsel %vm550, %v547, %v549
      %v552 = vsel %vm550, %v549, %v547
      %s553 = scalar_lea.vmem %s4, 3
      %v554 = vld [vmem:[%s553] ss:$8 sm:$0x3]
      %v556 = vlaneseq
      %v557 = vshrl.u32 %v556, 7
      %v558 = vsub.s32 0, %v557
      %v559 = vrot.slane %v554, %v558
      %v560 = vlaneseq
      %v561 = vshrl.u32 %v560, 7
      %v562 = vsub.s32 1, %v561
      %v563 = vrot.slane %v554, %v562
      %v566 = vmul.f32 %v552, %v559
      %v567 = vmul.f32 %v551, %v563
      %s568 = scalar_lea.vmem %s1, 12
      %v569 = vld [vmem:[%s568] sm:$0xf]
      %v571 = vsel %vm278, %v569, 0
      %v574 = vsel %vm282, %v566, 0
      %v577 = vsel %vm282, %v567, 0
      %579 = vmatprep.subr.mxu0 %v577
      %580 = vmatpush1.msra.mxu0 %v574
      %581 = vmatprep.subr.mxu0 0.0
      %582 = vmatpush1.msra.mxu0 0.0
      %583 = vmatprep.subr.mxu0 0.0
      %584 = vmatpush1.msra.mxu0 0.0
      %585 = vmatprep.subr.mxu0 0.0
      %586 = vmatpush1.msra.mxu0 0.0
      %587 = vmatprep.subr.mxu0 0.0
      %588 = vmatpush1.msra.mxu0 0.0
      %589 = vmatprep.subr.mxu0 0.0
      %590 = vmatpush1.msra.mxu0 0.0
      %591 = vmatprep.subr.mxu0 0.0
      %592 = vmatpush1.msra.mxu0 0.0
      %593 = vmatprep.subr.mxu0 0.0
      %594 = vmatpush1.msra.mxu0 0.0
      %595 = vmatprep.subr.mxu0 0.0
      %596 = vmatpush1.msra.mxu0 0.0
      %597 = vmatprep.subr.mxu0 0.0
      %598 = vmatpush1.msra.mxu0 0.0
      %599 = vmatprep.subr.mxu0 0.0
      %600 = vmatpush1.msra.mxu0 0.0
      %601 = vmatprep.subr.mxu0 0.0
      %602 = vmatpush1.msra.mxu0 0.0
      %603 = vmatprep.subr.mxu0 0.0
      %604 = vmatpush1.msra.mxu0 0.0
      %605 = vmatprep.subr.mxu0 0.0
      %606 = vmatpush1.msra.mxu0 0.0
      %607 = vmatprep.subr.mxu0 0.0
      %608 = vmatpush1.msra.mxu0 0.0
      %609 = vmatprep.subr.mxu0 0.0
      %610 = vmatpush1.msra.mxu0 0.0
      %611 = vmatprep.subr.mxu0 0.0
      %612 = vmatpush1.msra.mxu0 0.0
      %613 = vmatprep.subr.mxu0 0.0
      %614 = vmatpush1.msra.mxu0 0.0
      %615 = vmatprep.subr.mxu0 0.0
      %616 = vmatpush1.msra.mxu0 0.0
      %617 = vmatprep.subr.mxu0 0.0
      %618 = vmatpush1.msra.mxu0 0.0
      %619 = vmatprep.subr.mxu0 0.0
      %620 = vmatpush1.msra.mxu0 0.0
      %621 = vmatprep.subr.mxu0 0.0
      %622 = vmatpush1.msra.mxu0 0.0
      %623 = vmatprep.subr.mxu0 0.0
      %624 = vmatpush1.msra.mxu0 0.0
      %625 = vmatprep.subr.mxu0 0.0
      %626 = vmatpush1.msra.mxu0 0.0
      %627 = vmatprep.subr.mxu0 0.0
      %628 = vmatpush1.msra.mxu0 0.0
      %629 = vmatprep.subr.mxu0 0.0
      %630 = vmatpush1.msra.mxu0 0.0
      %631 = vmatprep.subr.mxu0 0.0
      %632 = vmatpush1.msra.mxu0 0.0
      %633 = vmatprep.subr.mxu0 0.0
      %634 = vmatpush1.msra.mxu0 0.0
      %635 = vmatprep.subr.mxu0 0.0
      %636 = vmatpush1.msra.mxu0 0.0
      %637 = vmatprep.subr.mxu0 0.0
      %638 = vmatpush1.msra.mxu0 0.0
      %639 = vmatprep.subr.mxu0 0.0
      %640 = vmatpush1.msra.mxu0 0.0
      %641 = vmatprep.subr.mxu0 0.0
      %642 = vmatpush1.msra.mxu0 0.0
      %643 = vmatprep.mubr.f32.mxu0 0.0
      %644 = vmatmul.mubr.f32.gmra.mrb[0].mxu0 %v571
      %v645 = vpop.f32.mrb[0].mxu0
      %v646 = vadd.f32 0.0, %v645
      %v647 = vpop.f32.mrb[0].mxu0
      %v648 = vadd.f32 0.0, %v647
      %649 = vdwg.mxu0
      %v650 = vadd.f32 %v544, %v646
      %v651 = vadd.f32 %v545, %v648
      %s652 = scalar_lea.vmem %s1, 16
      %v653 = vld [vmem:[%s652] sm:$0xf]
      %v655 = vsel %vm278, %v653, 0
      %v657 = vsel %vm282, %v225, 0
      %v659 = vsel %vm282, %v228, 0
      %661 = vmatprep.subr.mxu0 %v659
      %662 = vmatpush1.msra.mxu0 %v657
      %663 = vmatprep.subr.mxu0 0.0
      %664 = vmatpush1.msra.mxu0 0.0
      %665 = vmatprep.subr.mxu0 0.0
      %666 = vmatpush1.msra.mxu0 0.0
      %667 = vmatprep.subr.mxu0 0.0
      %668 = vmatpush1.msra.mxu0 0.0
      %669 = vmatprep.subr.mxu0 0.0
      %670 = vmatpush1.msra.mxu0 0.0
      %671 = vmatprep.subr.mxu0 0.0
      %672 = vmatpush1.msra.mxu0 0.0
      %673 = vmatprep.subr.mxu0 0.0
      %674 = vmatpush1.msra.mxu0 0.0
      %675 = vmatprep.subr.mxu0 0.0
      %676 = vmatpush1.msra.mxu0 0.0
      %677 = vmatprep.subr.mxu0 0.0
      %678 = vmatpush1.msra.mxu0 0.0
      %679 = vmatprep.subr.mxu0 0.0
      %680 = vmatpush1.msra.mxu0 0.0
      %681 = vmatprep.subr.mxu0 0.0
      %682 = vmatpush1.msra.mxu0 0.0
      %683 = vmatprep.subr.mxu0 0.0
      %684 = vmatpush1.msra.mxu0 0.0
      %685 = vmatprep.subr.mxu0 0.0
      %686 = vmatpush1.msra.mxu0 0.0
      %687 = vmatprep.subr.mxu0 0.0
      %688 = vmatpush1.msra.mxu0 0.0
      %689 = vmatprep.subr.mxu0 0.0
      %690 = vmatpush1.msra.mxu0 0.0
      %691 = vmatprep.subr.mxu0 0.0
      %692 = vmatpush1.msra.mxu0 0.0
      %693 = vmatprep.subr.mxu0 0.0
      %694 = vmatpush1.msra.mxu0 0.0
      %695 = vmatprep.subr.mxu0 0.0
      %696 = vmatpush1.msra.mxu0 0.0
      %697 = vmatprep.subr.mxu0 0.0
      %698 = vmatpush1.msra.mxu0 0.0
      %699 = vmatprep.subr.mxu0 0.0
      %700 = vmatpush1.msra.mxu0 0.0
      %701 = vmatprep.subr.mxu0 0.0
      %702 = vmatpush1.msra.mxu0 0.0
      %703 = vmatprep.subr.mxu0 0.0
      %704 = vmatpush1.msra.mxu0 0.0
      %705 = vmatprep.subr.mxu0 0.0
      %706 = vmatpush1.msra.mxu0 0.0
      %707 = vmatprep.subr.mxu0 0.0
      %708 = vmatpush1.msra.mxu0 0.0
      %709 = vmatprep.subr.mxu0 0.0
      %710 = vmatpush1.msra.mxu0 0.0
      %711 = vmatprep.subr.mxu0 0.0
      %712 = vmatpush1.msra.mxu0 0.0
      %713 = vmatprep.subr.mxu0 0.0
      %714 = vmatpush1.msra.mxu0 0.0
      %715 = vmatprep.subr.mxu0 0.0
      %716 = vmatpush1.msra.mxu0 0.0
      %717 = vmatprep.subr.mxu0 0.0
      %718 = vmatpush1.msra.mxu0 0.0
      %719 = vmatprep.subr.mxu0 0.0
      %720 = vmatpush1.msra.mxu0 0.0
      %721 = vmatprep.subr.mxu0 0.0
      %722 = vmatpush1.msra.mxu0 0.0
      %723 = vmatprep.subr.mxu0 0.0
      %724 = vmatpush1.msra.mxu0 0.0
      %725 = vmatprep.mubr.f32.mxu0 0.0
      %726 = vmatmul.mubr.f32.gmra.mrb[0].mxu0 %v655
      %v727 = vpop.f32.mrb[0].mxu0
      %v728 = vadd.f32 0.0, %v727
      %v729 = vpop.f32.mrb[0].mxu0
      %v730 = vadd.f32 0.0, %v729
      %731 = vdwg.mxu0
      %v732 = vadd.f32 %v650, %v728
      %v733 = vadd.f32 %v651, %v730
      %734 = vrot.lane.b32.xlu0 %v225, 127
      %v735 = vpop.permute.xlu0 %734
      %736 = vrot.lane.b32.xlu0 %v228, 127
      %v737 = vpop.permute.xlu0 %736
      %vm738 = vcmp.lt.s32.totalorder %v235, 127
      %v739 = vsel %vm738, %v735, %v737
      %v740 = vsel %vm738, %v737, %v735
      %s741 = scalar_lea.vmem %s4, 5
      %v742 = vld [vmem:[%s741] ss:$8 sm:$0x3]
      %v744 = vlaneseq
      %v745 = vshrl.u32 %v744, 7
      %v746 = vsub.s32 0, %v745
      %v747 = vrot.slane %v742, %v746
      %v748 = vlaneseq
      %v749 = vshrl.u32 %v748, 7
      %v750 = vsub.s32 1, %v749
      %v751 = vrot.slane %v742, %v750
      %v754 = vmul.f32 %v739, %v747
      %v755 = vmul.f32 %v740, %v751
      %s756 = scalar_lea.vmem %s1, 20
      %v757 = vld [vmem:[%s756] sm:$0xf]
      %v759 = vsel %vm278, %v757, 0
      %v762 = vsel %vm282, %v754, 0
      %v765 = vsel %vm282, %v755, 0
      %767 = vmatprep.subr.mxu0 %v765
      %768 = vmatpush1.msra.mxu0 %v762
      %769 = vmatprep.subr.mxu0 0.0
      %770 = vmatpush1.msra.mxu0 0.0
      %771 = vmatprep.subr.mxu0 0.0
      %772 = vmatpush1.msra.mxu0 0.0
      %773 = vmatprep.subr.mxu0 0.0
      %774 = vmatpush1.msra.mxu0 0.0
      %775 = vmatprep.subr.mxu0 0.0
      %776 = vmatpush1.msra.mxu0 0.0
      %777 = vmatprep.subr.mxu0 0.0
      %778 = vmatpush1.msra.mxu0 0.0
      %779 = vmatprep.subr.mxu0 0.0
      %780 = vmatpush1.msra.mxu0 0.0
      %781 = vmatprep.subr.mxu0 0.0
      %782 = vmatpush1.msra.mxu0 0.0
      %783 = vmatprep.subr.mxu0 0.0
      %784 = vmatpush1.msra.mxu0 0.0
      %785 = vmatprep.subr.mxu0 0.0
      %786 = vmatpush1.msra.mxu0 0.0
      %787 = vmatprep.subr.mxu0 0.0
      %788 = vmatpush1.msra.mxu0 0.0
      %789 = vmatprep.subr.mxu0 0.0
      %790 = vmatpush1.msra.mxu0 0.0
      %791 = vmatprep.subr.mxu0 0.0
      %792 = vmatpush1.msra.mxu0 0.0
      %793 = vmatprep.subr.mxu0 0.0
      %794 = vmatpush1.msra.mxu0 0.0
      %795 = vmatprep.subr.mxu0 0.0
      %796 = vmatpush1.msra.mxu0 0.0
      %797 = vmatprep.subr.mxu0 0.0
      %798 = vmatpush1.msra.mxu0 0.0
      %799 = vmatprep.subr.mxu0 0.0
      %800 = vmatpush1.msra.mxu0 0.0
      %801 = vmatprep.subr.mxu0 0.0
      %802 = vmatpush1.msra.mxu0 0.0
      %803 = vmatprep.subr.mxu0 0.0
      %804 = vmatpush1.msra.mxu0 0.0
      %805 = vmatprep.subr.mxu0 0.0
      %806 = vmatpush1.msra.mxu0 0.0
      %807 = vmatprep.subr.mxu0 0.0
      %808 = vmatpush1.msra.mxu0 0.0
      %809 = vmatprep.subr.mxu0 0.0
      %810 = vmatpush1.msra.mxu0 0.0
      %811 = vmatprep.subr.mxu0 0.0
      %812 = vmatpush1.msra.mxu0 0.0
      %813 = vmatprep.subr.mxu0 0.0
      %814 = vmatpush1.msra.mxu0 0.0
      %815 = vmatprep.subr.mxu0 0.0
      %816 = vmatpush1.msra.mxu0 0.0
      %817 = vmatprep.subr.mxu0 0.0
      %818 = vmatpush1.msra.mxu0 0.0
      %819 = vmatprep.subr.mxu0 0.0
      %820 = vmatpush1.msra.mxu0 0.0
      %821 = vmatprep.subr.mxu0 0.0
      %822 = vmatpush1.msra.mxu0 0.0
      %823 = vmatprep.subr.mxu0 0.0
      %824 = vmatpush1.msra.mxu0 0.0
      %825 = vmatprep.subr.mxu0 0.0
      %826 = vmatpush1.msra.mxu0 0.0
      %827 = vmatprep.subr.mxu0 0.0
      %828 = vmatpush1.msra.mxu0 0.0
      %829 = vmatprep.subr.mxu0 0.0
      %830 = vmatpush1.msra.mxu0 0.0
      %831 = vmatprep.mubr.f32.mxu0 0.0
      %832 = vmatmul.mubr.f32.gmra.mrb[0].mxu0 %v759
      %v833 = vpop.f32.mrb[0].mxu0
      %v834 = vadd.f32 0.0, %v833
      %v835 = vpop.f32.mrb[0].mxu0
      %v836 = vadd.f32 0.0, %v835
      %837 = vdwg.mxu0
      %v838 = vadd.f32 %v732, %v834
      %v839 = vadd.f32 %v733, %v836
      %840 = vrot.lane.b32.xlu0 %v225, 113
      %v841 = vpop.permute.xlu0 %840
      %842 = vrot.lane.b32.xlu0 %v228, 113
      %v843 = vpop.permute.xlu0 %842
      %vm844 = vcmp.lt.s32.totalorder %v235, 113
      %v845 = vsel %vm844, %v841, %v843
      %v846 = vsel %vm844, %v843, %v841
      %s847 = scalar_lea.vmem %s4, 6
      %v848 = vld [vmem:[%s847] ss:$8 sm:$0x3]
      %v850 = vlaneseq
      %v851 = vshrl.u32 %v850, 7
      %v852 = vsub.s32 0, %v851
      %v853 = vrot.slane %v848, %v852
      %v854 = vlaneseq
      %v855 = vshrl.u32 %v854, 7
      %v856 = vsub.s32 1, %v855
      %v857 = vrot.slane %v848, %v856
      %v860 = vmul.f32 %v845, %v853
      %v861 = vmul.f32 %v846, %v857
      %s862 = scalar_lea.vmem %s1, 24
      %v863 = vld [vmem:[%s862] sm:$0xf]
      %v865 = vsel %vm278, %v863, 0
      %v868 = vsel %vm282, %v860, 0
      %v871 = vsel %vm282, %v861, 0
      %873 = vmatprep.subr.mxu0 %v871
      %874 = vmatpush1.msra.mxu0 %v868
      %875 = vmatprep.subr.mxu0 0.0
      %876 = vmatpush1.msra.mxu0 0.0
      %877 = vmatprep.subr.mxu0 0.0
      %878 = vmatpush1.msra.mxu0 0.0
      %879 = vmatprep.subr.mxu0 0.0
      %880 = vmatpush1.msra.mxu0 0.0
      %881 = vmatprep.subr.mxu0 0.0
      %882 = vmatpush1.msra.mxu0 0.0
      %883 = vmatprep.subr.mxu0 0.0
      %884 = vmatpush1.msra.mxu0 0.0
      %885 = vmatprep.subr.mxu0 0.0
      %886 = vmatpush1.msra.mxu0 0.0
      %887 = vmatprep.subr.mxu0 0.0
      %888 = vmatpush1.msra.mxu0 0.0
      %889 = vmatprep.subr.mxu0 0.0
      %890 = vmatpush1.msra.mxu0 0.0
      %891 = vmatprep.subr.mxu0 0.0
      %892 = vmatpush1.msra.mxu0 0.0
      %893 = vmatprep.subr.mxu0 0.0
      %894 = vmatpush1.msra.mxu0 0.0
      %895 = vmatprep.subr.mxu0 0.0
      %896 = vmatpush1.msra.mxu0 0.0
      %897 = vmatprep.subr.mxu0 0.0
      %898 = vmatpush1.msra.mxu0 0.0
      %899 = vmatprep.subr.mxu0 0.0
      %900 = vmatpush1.msra.mxu0 0.0
      %901 = vmatprep.subr.mxu0 0.0
      %902 = vmatpush1.msra.mxu0 0.0
      %903 = vmatprep.subr.mxu0 0.0
      %904 = vmatpush1.msra.mxu0 0.0
      %905 = vmatprep.subr.mxu0 0.0
      %906 = vmatpush1.msra.mxu0 0.0
      %907 = vmatprep.subr.mxu0 0.0
      %908 = vmatpush1.msra.mxu0 0.0
      %909 = vmatprep.subr.mxu0 0.0
      %910 = vmatpush1.msra.mxu0 0.0
      %911 = vmatprep.subr.mxu0 0.0
      %912 = vmatpush1.msra.mxu0 0.0
      %913 = vmatprep.subr.mxu0 0.0
      %914 = vmatpush1.msra.mxu0 0.0
      %915 = vmatprep.subr.mxu0 0.0
      %916 = vmatpush1.msra.mxu0 0.0
      %917 = vmatprep.subr.mxu0 0.0
      %918 = vmatpush1.msra.mxu0 0.0
      %919 = vmatprep.subr.mxu0 0.0
      %920 = vmatpush1.msra.mxu0 0.0
      %921 = vmatprep.subr.mxu0 0.0
      %922 = vmatpush1.msra.mxu0 0.0
      %923 = vmatprep.subr.mxu0 0.0
      %924 = vmatpush1.msra.mxu0 0.0
      %925 = vmatprep.subr.mxu0 0.0
      %926 = vmatpush1.msra.mxu0 0.0
      %927 = vmatprep.subr.mxu0 0.0
      %928 = vmatpush1.msra.mxu0 0.0
      %929 = vmatprep.subr.mxu0 0.0
      %930 = vmatpush1.msra.mxu0 0.0
      %931 = vmatprep.subr.mxu0 0.0
      %932 = vmatpush1.msra.mxu0 0.0
      %933 = vmatprep.subr.mxu0 0.0
      %934 = vmatpush1.msra.mxu0 0.0
      %935 = vmatprep.subr.mxu0 0.0
      %936 = vmatpush1.msra.mxu0 0.0
      %937 = vmatprep.mubr.f32.mxu0 0.0
      %938 = vmatmul.mubr.f32.gmra.mrb[0].mxu0 %v865
      %v939 = vpop.f32.mrb[0].mxu0
      %v940 = vadd.f32 0.0, %v939
      %v941 = vpop.f32.mrb[0].mxu0
      %v942 = vadd.f32 0.0, %v941
      %943 = vdwg.mxu0
      %v944 = vadd.f32 %v838, %v940
      %v945 = vadd.f32 %v839, %v942
      %946 = vrot.lane.b32.xlu0 %v225, 112
      %v947 = vpop.permute.xlu0 %946
      %948 = vrot.lane.b32.xlu0 %v228, 112
      %v949 = vpop.permute.xlu0 %948
      %vm950 = vcmp.lt.s32.totalorder %v235, 112
      %v951 = vsel %vm950, %v947, %v949
      %v952 = vsel %vm950, %v949, %v947
      %s953 = scalar_lea.vmem %s4, 7
      %v954 = vld [vmem:[%s953] ss:$8 sm:$0x3]
      %v956 = vlaneseq
      %v957 = vshrl.u32 %v956, 7
      %v958 = vsub.s32 0, %v957
      %v959 = vrot.slane %v954, %v958
      %v960 = vlaneseq
      %v961 = vshrl.u32 %v960, 7
      %v962 = vsub.s32 1, %v961
      %v963 = vrot.slane %v954, %v962
      %v966 = vmul.f32 %v951, %v959
      %v967 = vmul.f32 %v952, %v963
      %s968 = scalar_lea.vmem %s1, 28
      %v969 = vld [vmem:[%s968] sm:$0xf]
      %v971 = vsel %vm278, %v969, 0
      %v974 = vsel %vm282, %v966, 0
      %v977 = vsel %vm282, %v967, 0
      %979 = vmatprep.subr.mxu0 %v977
      %980 = vmatpush1.msra.mxu0 %v974
      %981 = vmatprep.subr.mxu0 0.0
      %982 = vmatpush1.msra.mxu0 0.0
      %983 = vmatprep.subr.mxu0 0.0
      %984 = vmatpush1.msra.mxu0 0.0
      %985 = vmatprep.subr.mxu0 0.0
      %986 = vmatpush1.msra.mxu0 0.0
      %987 = vmatprep.subr.mxu0 0.0
      %988 = vmatpush1.msra.mxu0 0.0
      %989 = vmatprep.subr.mxu0 0.0
      %990 = vmatpush1.msra.mxu0 0.0
      %991 = vmatprep.subr.mxu0 0.0
      %992 = vmatpush1.msra.mxu0 0.0
      %993 = vmatprep.subr.mxu0 0.0
      %994 = vmatpush1.msra.mxu0 0.0
      %995 = vmatprep.subr.mxu0 0.0
      %996 = vmatpush1.msra.mxu0 0.0
      %997 = vmatprep.subr.mxu0 0.0
      %998 = vmatpush1.msra.mxu0 0.0
      %999 = vmatprep.subr.mxu0 0.0
      %1000 = vmatpush1.msra.mxu0 0.0
      %1001 = vmatprep.subr.mxu0 0.0
      %1002 = vmatpush1.msra.mxu0 0.0
      %1003 = vmatprep.subr.mxu0 0.0
      %1004 = vmatpush1.msra.mxu0 0.0
      %1005 = vmatprep.subr.mxu0 0.0
      %1006 = vmatpush1.msra.mxu0 0.0
      %1007 = vmatprep.subr.mxu0 0.0
      %1008 = vmatpush1.msra.mxu0 0.0
      %1009 = vmatprep.subr.mxu0 0.0
      %1010 = vmatpush1.msra.mxu0 0.0
      %1011 = vmatprep.subr.mxu0 0.0
      %1012 = vmatpush1.msra.mxu0 0.0
      %1013 = vmatprep.subr.mxu0 0.0
      %1014 = vmatpush1.msra.mxu0 0.0
      %1015 = vmatprep.subr.mxu0 0.0
      %1016 = vmatpush1.msra.mxu0 0.0
      %1017 = vmatprep.subr.mxu0 0.0
      %1018 = vmatpush1.msra.mxu0 0.0
      %1019 = vmatprep.subr.mxu0 0.0
      %1020 = vmatpush1.msra.mxu0 0.0
      %1021 = vmatprep.subr.mxu0 0.0
      %1022 = vmatpush1.msra.mxu0 0.0
      %1023 = vmatprep.subr.mxu0 0.0
      %1024 = vmatpush1.msra.mxu0 0.0
      %1025 = vmatprep.subr.mxu0 0.0
      %1026 = vmatpush1.msra.mxu0 0.0
      %1027 = vmatprep.subr.mxu0 0.0
      %1028 = vmatpush1.msra.mxu0 0.0
      %1029 = vmatprep.subr.mxu0 0.0
      %1030 = vmatpush1.msra.mxu0 0.0
      %1031 = vmatprep.subr.mxu0 0.0
      %1032 = vmatpush1.msra.mxu0 0.0
      %1033 = vmatprep.subr.mxu0 0.0
      %1034 = vmatpush1.msra.mxu0 0.0
      %1035 = vmatprep.subr.mxu0 0.0
      %1036 = vmatpush1.msra.mxu0 0.0
      %1037 = vmatprep.subr.mxu0 0.0
      %1038 = vmatpush1.msra.mxu0 0.0
      %1039 = vmatprep.subr.mxu0 0.0
      %1040 = vmatpush1.msra.mxu0 0.0
      %1041 = vmatprep.subr.mxu0 0.0
      %1042 = vmatpush1.msra.mxu0 0.0
      %1043 = vmatprep.mubr.f32.mxu0 0.0
      %1044 = vmatmul.mubr.f32.gmra.mrb[0].mxu0 %v971
      %v1045 = vpop.f32.mrb[0].mxu0
      %v1046 = vadd.f32 0.0, %v1045
      %v1047 = vpop.f32.mrb[0].mxu0
      %v1048 = vadd.f32 0.0, %v1047
      %1049 = vdwg.mxu0
      %v1050 = vadd.f32 %v944, %v1046
      %v1051 = vadd.f32 %v945, %v1048
      %1052 = vrot.lane.b32.xlu0 %v225, 111
      %v1053 = vpop.permute.xlu0 %1052
      %1054 = vrot.lane.b32.xlu0 %v228, 111
      %v1055 = vpop.permute.xlu0 %1054
      %vm1056 = vcmp.lt.s32.totalorder %v235, 111
      %v1057 = vsel %vm1056, %v1053, %v1055
      %v1058 = vsel %vm1056, %v1055, %v1053
      %s1059 = scalar_lea.vmem %s4, 16
      %v1060 = vld [vmem:[%s1059] ss:$8 sm:$0x3]
      %v1062 = vlaneseq
      %v1063 = vshrl.u32 %v1062, 7
      %v1064 = vsub.s32 0, %v1063
      %v1065 = vrot.slane %v1060, %v1064
      %v1066 = vlaneseq
      %v1067 = vshrl.u32 %v1066, 7
      %v1068 = vsub.s32 1, %v1067
      %v1069 = vrot.slane %v1060, %v1068
      %v1072 = vmul.f32 %v1057, %v1065
      %v1073 = vmul.f32 %v1058, %v1069
      %s1074 = scalar_lea.vmem %s1, 32
      %v1075 = vld [vmem:[%s1074] sm:$0xf]
      %v1077 = vsel %vm278, %v1075, 0
      %v1080 = vsel %vm282, %v1072, 0
      %v1083 = vsel %vm282, %v1073, 0
      %1085 = vmatprep.subr.mxu0 %v1083
      %1086 = vmatpush1.msra.mxu0 %v1080
      %1087 = vmatprep.subr.mxu0 0.0
      %1088 = vmatpush1.msra.mxu0 0.0
      %1089 = vmatprep.subr.mxu0 0.0
      %1090 = vmatpush1.msra.mxu0 0.0
      %1091 = vmatprep.subr.mxu0 0.0
      %1092 = vmatpush1.msra.mxu0 0.0
      %1093 = vmatprep.subr.mxu0 0.0
      %1094 = vmatpush1.msra.mxu0 0.0
      %1095 = vmatprep.subr.mxu0 0.0
      %1096 = vmatpush1.msra.mxu0 0.0
      %1097 = vmatprep.subr.mxu0 0.0
      %1098 = vmatpush1.msra.mxu0 0.0
      %1099 = vmatprep.subr.mxu0 0.0
      %1100 = vmatpush1.msra.mxu0 0.0
      %1101 = vmatprep.subr.mxu0 0.0
      %1102 = vmatpush1.msra.mxu0 0.0
      %1103 = vmatprep.subr.mxu0 0.0
      %1104 = vmatpush1.msra.mxu0 0.0
      %1105 = vmatprep.subr.mxu0 0.0
      %1106 = vmatpush1.msra.mxu0 0.0
      %1107 = vmatprep.subr.mxu0 0.0
      %1108 = vmatpush1.msra.mxu0 0.0
      %1109 = vmatprep.subr.mxu0 0.0
      %1110 = vmatpush1.msra.mxu0 0.0
      %1111 = vmatprep.subr.mxu0 0.0
      %1112 = vmatpush1.msra.mxu0 0.0
      %1113 = vmatprep.subr.mxu0 0.0
      %1114 = vmatpush1.msra.mxu0 0.0
      %1115 = vmatprep.subr.mxu0 0.0
      %1116 = vmatpush1.msra.mxu0 0.0
      %1117 = vmatprep.subr.mxu0 0.0
      %1118 = vmatpush1.msra.mxu0 0.0
      %1119 = vmatprep.subr.mxu0 0.0
      %1120 = vmatpush1.msra.mxu0 0.0
      %1121 = vmatprep.subr.mxu0 0.0
      %1122 = vmatpush1.msra.mxu0 0.0
      %1123 = vmatprep.subr.mxu0 0.0
      %1124 = vmatpush1.msra.mxu0 0.0
      %1125 = vmatprep.subr.mxu0 0.0
      %1126 = vmatpush1.msra.mxu0 0.0
      %1127 = vmatprep.subr.mxu0 0.0
      %1128 = vmatpush1.msra.mxu0 0.0
      %1129 = vmatprep.subr.mxu0 0.0
      %1130 = vmatpush1.msra.mxu0 0.0
      %1131 = vmatprep.subr.mxu0 0.0
      %1132 = vmatpush1.msra.mxu0 0.0
      %1133 = vmatprep.subr.mxu0 0.0
      %1134 = vmatpush1.msra.mxu0 0.0
      %1135 = vmatprep.subr.mxu0 0.0
      %1136 = vmatpush1.msra.mxu0 0.0
      %1137 = vmatprep.subr.mxu0 0.0
      %1138 = vmatpush1.msra.mxu0 0.0
      %1139 = vmatprep.subr.mxu0 0.0
      %1140 = vmatpush1.msra.mxu0 0.0
      %1141 = vmatprep.subr.mxu0 0.0
      %1142 = vmatpush1.msra.mxu0 0.0
      %1143 = vmatprep.subr.mxu0 0.0
      %1144 = vmatpush1.msra.mxu0 0.0
      %1145 = vmatprep.subr.mxu0 0.0
      %1146 = vmatpush1.msra.mxu0 0.0
      %1147 = vmatprep.subr.mxu0 0.0
      %1148 = vmatpush1.msra.mxu0 0.0
      %1149 = vmatprep.mubr.f32.mxu0 0.0
      %1150 = vmatmul.mubr.f32.gmra.mrb[0].mxu0 %v1077
      %v1151 = vpop.f32.mrb[0].mxu0
      %v1152 = vadd.f32 0.0, %v1151
      %v1153 = vpop.f32.mrb[0].mxu0
      %v1154 = vadd.f32 0.0, %v1153
      %1155 = vdwg.mxu0
      %v1156 = vadd.f32 %v1050, %v1152
      %v1157 = vadd.f32 %v1051, %v1154
      %v1158 = vsel %vm282, %v1156, 0.0
      %v1159 = vsel %vm282, %v1157, 0.0
      %v1160 = vadd.f32 %v1158, %v1159
      %1161 = vadd.xlane.f32.xlu0 %v1160
      %v1162 = vpop.xlane.xlu0 %1161
      %v1163 = vrcp.pop 256.0
      %v1164 = vmul.f32 %v1162, %v1163
      %v1165 = vsub.f32 %v1156, %v1164
      %v1166 = vsub.f32 %v1157, %v1164
      %v1167 = vmul.f32 %v1165, %v1165
      %v1168 = vmul.f32 %v1166, %v1166
      %v1169 = vsel %vm282, %v1167, 0.0
      %v1170 = vsel %vm282, %v1168, 0.0
      %v1171 = vadd.f32 %v1169, %v1170
      %1172 = vadd.xlane.f32.xlu0 %v1171
      %v1173 = vpop.xlane.xlu0 %1172
      %v1174 = vmul.f32 %v1173, %v1163
      %v1175 = vadd.f32 %v1174, 1e-05
      %v1176 = vrsqrt.pop %v1175
      %v1177 = vmul.f32 %v1165, %v1176
      %v1178 = vmul.f32 %v1166, %v1176
      %1180 = vset.pattern.permute.xlu0 0
      %1181 = vperm.xlu0 %1180, %v226
      %v1182 = vpop.permute.xlu0 %1181
      %v1184 = vmul.f32 %v1177, %v1182
      %v1185 = vmul.f32 %v1178, %v1182
      %1186 = vset.pattern.permute.xlu0 1
      %1187 = vperm.xlu0 %1186, %v226
      %v1188 = vpop.permute.xlu0 %1187
      %v1190 = vadd.f32 %v1184, %v1188
      %v1191 = vadd.f32 %v1185, %v1188
      %v1192 = vmax.f32 %v1190, 0.0
      %v1193 = vmax.f32 %v1191, 0.0
      %1194 = vrot.lane.b32.xlu0 %v1192, 17
      %v1195 = vpop.permute.xlu0 %1194
      %1196 = vrot.lane.b32.xlu0 %v1193, 17
      %v1197 = vpop.permute.xlu0 %1196
      %v1198 = vsel %vm236, %v1195, %v1197
      %v1199 = vsel %vm236, %v1197, %v1195
      %v1200 = vmul.f32 %v1199, %v244
      %v1201 = vmul.f32 %v1198, %v248
      %v1202 = vld [vmem:[%s2] sm:$0xf]
      %1203 = vrot.lane.b32.xlu0 %v1192, 16
      %v1204 = vpop.permute.xlu0 %1203
      %1205 = vrot.lane.b32.xlu0 %v1193, 16
      %v1206 = vpop.permute.xlu0 %1205
      %v1207 = vsel %vm258, %v1204, %v1206
      %v1208 = vsel %vm258, %v1206, %v1204
      %v1209 = vmul.f32 %v1208, %v267
      %v1210 = vmul.f32 %v1207, %v271
      %s1211 = scalar_lea.vmem %s2, 4
      %v1212 = vld [vmem:[%s1211] sm:$0xf]
      %v1214 = vsel %vm278, %v1212, 0
      %v1217 = vsel %vm282, %v1209, 0
      %v1220 = vsel %vm282, %v1210, 0
      %1222 = vmatprep.subr.mxu0 %v1220
      %1223 = vmatpush1.msra.mxu0 %v1217
      %1224 = vmatprep.subr.mxu0 0.0
      %1225 = vmatpush1.msra.mxu0 0.0
      %1226 = vmatprep.subr.mxu0 0.0
      %1227 = vmatpush1.msra.mxu0 0.0
      %1228 = vmatprep.subr.mxu0 0.0
      %1229 = vmatpush1.msra.mxu0 0.0
      %1230 = vmatprep.subr.mxu0 0.0
      %1231 = vmatpush1.msra.mxu0 0.0
      %1232 = vmatprep.subr.mxu0 0.0
      %1233 = vmatpush1.msra.mxu0 0.0
      %1234 = vmatprep.subr.mxu0 0.0
      %1235 = vmatpush1.msra.mxu0 0.0
      %1236 = vmatprep.subr.mxu0 0.0
      %1237 = vmatpush1.msra.mxu0 0.0
      %1238 = vmatprep.subr.mxu0 0.0
      %1239 = vmatpush1.msra.mxu0 0.0
      %1240 = vmatprep.subr.mxu0 0.0
      %1241 = vmatpush1.msra.mxu0 0.0
      %1242 = vmatprep.subr.mxu0 0.0
      %1243 = vmatpush1.msra.mxu0 0.0
      %1244 = vmatprep.subr.mxu0 0.0
      %1245 = vmatpush1.msra.mxu0 0.0
      %1246 = vmatprep.subr.mxu0 0.0
      %1247 = vmatpush1.msra.mxu0 0.0
      %1248 = vmatprep.subr.mxu0 0.0
      %1249 = vmatpush1.msra.mxu0 0.0
      %1250 = vmatprep.subr.mxu0 0.0
      %1251 = vmatpush1.msra.mxu0 0.0
      %1252 = vmatprep.subr.mxu0 0.0
      %1253 = vmatpush1.msra.mxu0 0.0
      %1254 = vmatprep.subr.mxu0 0.0
      %1255 = vmatpush1.msra.mxu0 0.0
      %1256 = vmatprep.subr.mxu0 0.0
      %1257 = vmatpush1.msra.mxu0 0.0
      %1258 = vmatprep.subr.mxu0 0.0
      %1259 = vmatpush1.msra.mxu0 0.0
      %1260 = vmatprep.subr.mxu0 0.0
      %1261 = vmatpush1.msra.mxu0 0.0
      %1262 = vmatprep.subr.mxu0 0.0
      %1263 = vmatpush1.msra.mxu0 0.0
      %1264 = vmatprep.subr.mxu0 0.0
      %1265 = vmatpush1.msra.mxu0 0.0
      %1266 = vmatprep.subr.mxu0 0.0
      %1267 = vmatpush1.msra.mxu0 0.0
      %1268 = vmatprep.subr.mxu0 0.0
      %1269 = vmatpush1.msra.mxu0 0.0
      %1270 = vmatprep.subr.mxu0 0.0
      %1271 = vmatpush1.msra.mxu0 0.0
      %1272 = vmatprep.subr.mxu0 0.0
      %1273 = vmatpush1.msra.mxu0 0.0
      %1274 = vmatprep.subr.mxu0 0.0
      %1275 = vmatpush1.msra.mxu0 0.0
      %1276 = vmatprep.subr.mxu0 0.0
      %1277 = vmatpush1.msra.mxu0 0.0
      %1278 = vmatprep.subr.mxu0 0.0
      %1279 = vmatpush1.msra.mxu0 0.0
      %1280 = vmatprep.subr.mxu0 0.0
      %1281 = vmatpush1.msra.mxu0 0.0
      %1282 = vmatprep.subr.mxu0 0.0
      %1283 = vmatpush1.msra.mxu0 0.0
      %1284 = vmatprep.subr.mxu0 0.0
      %1285 = vmatpush1.msra.mxu0 0.0
      %1286 = vmatprep.mubr.f32.mxu0 0.0
      %1287 = vmatmul.mubr.f32.gmra.mrb[0].mxu0 %v1214
      %v1288 = vpop.f32.mrb[0].mxu0
      %v1289 = vadd.f32 0.0, %v1288
      %v1290 = vpop.f32.mrb[0].mxu0
      %v1291 = vadd.f32 0.0, %v1290
      %1292 = vdwg.mxu0
      %v1294 = vsel %vm278, %v1202, 0
      %v1297 = vsel %vm282, %v1200, 0
      %v1300 = vsel %vm282, %v1201, 0
      %1302 = vmatprep.subr.mxu0 %v1300
      %1303 = vmatpush1.msra.mxu0 %v1297
      %1304 = vmatprep.subr.mxu0 0.0
      %1305 = vmatpush1.msra.mxu0 0.0
      %1306 = vmatprep.subr.mxu0 0.0
      %1307 = vmatpush1.msra.mxu0 0.0
      %1308 = vmatprep.subr.mxu0 0.0
      %1309 = vmatpush1.msra.mxu0 0.0
      %1310 = vmatprep.subr.mxu0 0.0
      %1311 = vmatpush1.msra.mxu0 0.0
      %1312 = vmatprep.subr.mxu0 0.0
      %1313 = vmatpush1.msra.mxu0 0.0
      %1314 = vmatprep.subr.mxu0 0.0
      %1315 = vmatpush1.msra.mxu0 0.0
      %1316 = vmatprep.subr.mxu0 0.0
      %1317 = vmatpush1.msra.mxu0 0.0
      %1318 = vmatprep.subr.mxu0 0.0
      %1319 = vmatpush1.msra.mxu0 0.0
      %1320 = vmatprep.subr.mxu0 0.0
      %1321 = vmatpush1.msra.mxu0 0.0
      %1322 = vmatprep.subr.mxu0 0.0
      %1323 = vmatpush1.msra.mxu0 0.0
      %1324 = vmatprep.subr.mxu0 0.0
      %1325 = vmatpush1.msra.mxu0 0.0
      %1326 = vmatprep.subr.mxu0 0.0
      %1327 = vmatpush1.msra.mxu0 0.0
      %1328 = vmatprep.subr.mxu0 0.0
      %1329 = vmatpush1.msra.mxu0 0.0
      %1330 = vmatprep.subr.mxu0 0.0
      %1331 = vmatpush1.msra.mxu0 0.0
      %1332 = vmatprep.subr.mxu0 0.0
      %1333 = vmatpush1.msra.mxu0 0.0
      %1334 = vmatprep.subr.mxu0 0.0
      %1335 = vmatpush1.msra.mxu0 0.0
      %1336 = vmatprep.subr.mxu0 0.0
      %1337 = vmatpush1.msra.mxu0 0.0
      %1338 = vmatprep.subr.mxu0 0.0
      %1339 = vmatpush1.msra.mxu0 0.0
      %1340 = vmatprep.subr.mxu0 0.0
      %1341 = vmatpush1.msra.mxu0 0.0
      %1342 = vmatprep.subr.mxu0 0.0
      %1343 = vmatpush1.msra.mxu0 0.0
      %1344 = vmatprep.subr.mxu0 0.0
      %1345 = vmatpush1.msra.mxu0 0.0
      %1346 = vmatprep.subr.mxu0 0.0
      %1347 = vmatpush1.msra.mxu0 0.0
      %1348 = vmatprep.subr.mxu0 0.0
      %1349 = vmatpush1.msra.mxu0 0.0
      %1350 = vmatprep.subr.mxu0 0.0
      %1351 = vmatpush1.msra.mxu0 0.0
      %1352 = vmatprep.subr.mxu0 0.0
      %1353 = vmatpush1.msra.mxu0 0.0
      %1354 = vmatprep.subr.mxu0 0.0
      %1355 = vmatpush1.msra.mxu0 0.0
      %1356 = vmatprep.subr.mxu0 0.0
      %1357 = vmatpush1.msra.mxu0 0.0
      %1358 = vmatprep.subr.mxu0 0.0
      %1359 = vmatpush1.msra.mxu0 0.0
      %1360 = vmatprep.subr.mxu0 0.0
      %1361 = vmatpush1.msra.mxu0 0.0
      %1362 = vmatprep.subr.mxu0 0.0
      %1363 = vmatpush1.msra.mxu0 0.0
      %1364 = vmatprep.subr.mxu0 0.0
      %1365 = vmatpush1.msra.mxu0 0.0
      %1366 = vmatprep.mubr.f32.mxu0 0.0
      %1367 = vmatmul.mubr.f32.gmra.mrb[0].mxu0 %v1294
      %v1368 = vpop.f32.mrb[0].mxu0
      %v1369 = vadd.f32 %v1289, %v1368
      %v1370 = vpop.f32.mrb[0].mxu0
      %v1371 = vadd.f32 %v1291, %v1370
      %1372 = vdwg.mxu0
      %1373 = vrot.lane.b32.xlu0 %v1192, 15
      %v1374 = vpop.permute.xlu0 %1373
      %1375 = vrot.lane.b32.xlu0 %v1193, 15
      %v1376 = vpop.permute.xlu0 %1375
      %v1377 = vsel %vm444, %v1374, %v1376
      %v1378 = vsel %vm444, %v1376, %v1374
      %v1379 = vmul.f32 %v1378, %v453
      %v1380 = vmul.f32 %v1377, %v457
      %s1381 = scalar_lea.vmem %s2, 8
      %v1382 = vld [vmem:[%s1381] sm:$0xf]
      %v1384 = vsel %vm278, %v1382, 0
      %v1387 = vsel %vm282, %v1379, 0
      %v1390 = vsel %vm282, %v1380, 0
      %1392 = vmatprep.subr.mxu0 %v1390
      %1393 = vmatpush1.msra.mxu0 %v1387
      %1394 = vmatprep.subr.mxu0 0.0
      %1395 = vmatpush1.msra.mxu0 0.0
      %1396 = vmatprep.subr.mxu0 0.0
      %1397 = vmatpush1.msra.mxu0 0.0
      %1398 = vmatprep.subr.mxu0 0.0
      %1399 = vmatpush1.msra.mxu0 0.0
      %1400 = vmatprep.subr.mxu0 0.0
      %1401 = vmatpush1.msra.mxu0 0.0
      %1402 = vmatprep.subr.mxu0 0.0
      %1403 = vmatpush1.msra.mxu0 0.0
      %1404 = vmatprep.subr.mxu0 0.0
      %1405 = vmatpush1.msra.mxu0 0.0
      %1406 = vmatprep.subr.mxu0 0.0
      %1407 = vmatpush1.msra.mxu0 0.0
      %1408 = vmatprep.subr.mxu0 0.0
      %1409 = vmatpush1.msra.mxu0 0.0
      %1410 = vmatprep.subr.mxu0 0.0
      %1411 = vmatpush1.msra.mxu0 0.0
      %1412 = vmatprep.subr.mxu0 0.0
      %1413 = vmatpush1.msra.mxu0 0.0
      %1414 = vmatprep.subr.mxu0 0.0
      %1415 = vmatpush1.msra.mxu0 0.0
      %1416 = vmatprep.subr.mxu0 0.0
      %1417 = vmatpush1.msra.mxu0 0.0
      %1418 = vmatprep.subr.mxu0 0.0
      %1419 = vmatpush1.msra.mxu0 0.0
      %1420 = vmatprep.subr.mxu0 0.0
      %1421 = vmatpush1.msra.mxu0 0.0
      %1422 = vmatprep.subr.mxu0 0.0
      %1423 = vmatpush1.msra.mxu0 0.0
      %1424 = vmatprep.subr.mxu0 0.0
      %1425 = vmatpush1.msra.mxu0 0.0
      %1426 = vmatprep.subr.mxu0 0.0
      %1427 = vmatpush1.msra.mxu0 0.0
      %1428 = vmatprep.subr.mxu0 0.0
      %1429 = vmatpush1.msra.mxu0 0.0
      %1430 = vmatprep.subr.mxu0 0.0
      %1431 = vmatpush1.msra.mxu0 0.0
      %1432 = vmatprep.subr.mxu0 0.0
      %1433 = vmatpush1.msra.mxu0 0.0
      %1434 = vmatprep.subr.mxu0 0.0
      %1435 = vmatpush1.msra.mxu0 0.0
      %1436 = vmatprep.subr.mxu0 0.0
      %1437 = vmatpush1.msra.mxu0 0.0
      %1438 = vmatprep.subr.mxu0 0.0
      %1439 = vmatpush1.msra.mxu0 0.0
      %1440 = vmatprep.subr.mxu0 0.0
      %1441 = vmatpush1.msra.mxu0 0.0
      %1442 = vmatprep.subr.mxu0 0.0
      %1443 = vmatpush1.msra.mxu0 0.0
      %1444 = vmatprep.subr.mxu0 0.0
      %1445 = vmatpush1.msra.mxu0 0.0
      %1446 = vmatprep.subr.mxu0 0.0
      %1447 = vmatpush1.msra.mxu0 0.0
      %1448 = vmatprep.subr.mxu0 0.0
      %1449 = vmatpush1.msra.mxu0 0.0
      %1450 = vmatprep.subr.mxu0 0.0
      %1451 = vmatpush1.msra.mxu0 0.0
      %1452 = vmatprep.subr.mxu0 0.0
      %1453 = vmatpush1.msra.mxu0 0.0
      %1454 = vmatprep.subr.mxu0 0.0
      %1455 = vmatpush1.msra.mxu0 0.0
      %1456 = vmatprep.mubr.f32.mxu0 0.0
      %1457 = vmatmul.mubr.f32.gmra.mrb[0].mxu0 %v1384
      %v1458 = vpop.f32.mrb[0].mxu0
      %v1459 = vadd.f32 0.0, %v1458
      %v1460 = vpop.f32.mrb[0].mxu0
      %v1461 = vadd.f32 0.0, %v1460
      %1462 = vdwg.mxu0
      %v1463 = vadd.f32 %v1369, %v1459
      %v1464 = vadd.f32 %v1371, %v1461
      %1465 = vrot.lane.b32.xlu0 %v1192, 1
      %v1466 = vpop.permute.xlu0 %1465
      %1467 = vrot.lane.b32.xlu0 %v1193, 1
      %v1468 = vpop.permute.xlu0 %1467
      %v1469 = vsel %vm550, %v1466, %v1468
      %v1470 = vsel %vm550, %v1468, %v1466
      %v1471 = vmul.f32 %v1470, %v559
      %v1472 = vmul.f32 %v1469, %v563
      %s1473 = scalar_lea.vmem %s2, 12
      %v1474 = vld [vmem:[%s1473] sm:$0xf]
      %v1476 = vsel %vm278, %v1474, 0
      %v1479 = vsel %vm282, %v1471, 0
      %v1482 = vsel %vm282, %v1472, 0
      %1484 = vmatprep.subr.mxu0 %v1482
      %1485 = vmatpush1.msra.mxu0 %v1479
      %1486 = vmatprep.subr.mxu0 0.0
      %1487 = vmatpush1.msra.mxu0 0.0
      %1488 = vmatprep.subr.mxu0 0.0
      %1489 = vmatpush1.msra.mxu0 0.0
      %1490 = vmatprep.subr.mxu0 0.0
      %1491 = vmatpush1.msra.mxu0 0.0
      %1492 = vmatprep.subr.mxu0 0.0
      %1493 = vmatpush1.msra.mxu0 0.0
      %1494 = vmatprep.subr.mxu0 0.0
      %1495 = vmatpush1.msra.mxu0 0.0
      %1496 = vmatprep.subr.mxu0 0.0
      %1497 = vmatpush1.msra.mxu0 0.0
      %1498 = vmatprep.subr.mxu0 0.0
      %1499 = vmatpush1.msra.mxu0 0.0
      %1500 = vmatprep.subr.mxu0 0.0
      %1501 = vmatpush1.msra.mxu0 0.0
      %1502 = vmatprep.subr.mxu0 0.0
      %1503 = vmatpush1.msra.mxu0 0.0
      %1504 = vmatprep.subr.mxu0 0.0
      %1505 = vmatpush1.msra.mxu0 0.0
      %1506 = vmatprep.subr.mxu0 0.0
      %1507 = vmatpush1.msra.mxu0 0.0
      %1508 = vmatprep.subr.mxu0 0.0
      %1509 = vmatpush1.msra.mxu0 0.0
      %1510 = vmatprep.subr.mxu0 0.0
      %1511 = vmatpush1.msra.mxu0 0.0
      %1512 = vmatprep.subr.mxu0 0.0
      %1513 = vmatpush1.msra.mxu0 0.0
      %1514 = vmatprep.subr.mxu0 0.0
      %1515 = vmatpush1.msra.mxu0 0.0
      %1516 = vmatprep.subr.mxu0 0.0
      %1517 = vmatpush1.msra.mxu0 0.0
      %1518 = vmatprep.subr.mxu0 0.0
      %1519 = vmatpush1.msra.mxu0 0.0
      %1520 = vmatprep.subr.mxu0 0.0
      %1521 = vmatpush1.msra.mxu0 0.0
      %1522 = vmatprep.subr.mxu0 0.0
      %1523 = vmatpush1.msra.mxu0 0.0
      %1524 = vmatprep.subr.mxu0 0.0
      %1525 = vmatpush1.msra.mxu0 0.0
      %1526 = vmatprep.subr.mxu0 0.0
      %1527 = vmatpush1.msra.mxu0 0.0
      %1528 = vmatprep.subr.mxu0 0.0
      %1529 = vmatpush1.msra.mxu0 0.0
      %1530 = vmatprep.subr.mxu0 0.0
      %1531 = vmatpush1.msra.mxu0 0.0
      %1532 = vmatprep.subr.mxu0 0.0
      %1533 = vmatpush1.msra.mxu0 0.0
      %1534 = vmatprep.subr.mxu0 0.0
      %1535 = vmatpush1.msra.mxu0 0.0
      %1536 = vmatprep.subr.mxu0 0.0
      %1537 = vmatpush1.msra.mxu0 0.0
      %1538 = vmatprep.subr.mxu0 0.0
      %1539 = vmatpush1.msra.mxu0 0.0
      %1540 = vmatprep.subr.mxu0 0.0
      %1541 = vmatpush1.msra.mxu0 0.0
      %1542 = vmatprep.subr.mxu0 0.0
      %1543 = vmatpush1.msra.mxu0 0.0
      %1544 = vmatprep.subr.mxu0 0.0
      %1545 = vmatpush1.msra.mxu0 0.0
      %1546 = vmatprep.subr.mxu0 0.0
      %1547 = vmatpush1.msra.mxu0 0.0
      %1548 = vmatprep.mubr.f32.mxu0 0.0
      %1549 = vmatmul.mubr.f32.gmra.mrb[0].mxu0 %v1476
      %v1550 = vpop.f32.mrb[0].mxu0
      %v1551 = vadd.f32 0.0, %v1550
      %v1552 = vpop.f32.mrb[0].mxu0
      %v1553 = vadd.f32 0.0, %v1552
      %1554 = vdwg.mxu0
      %v1555 = vadd.f32 %v1463, %v1551
      %v1556 = vadd.f32 %v1464, %v1553
      %s1557 = scalar_lea.vmem %s2, 16
      %v1558 = vld [vmem:[%s1557] sm:$0xf]
      %v1560 = vsel %vm278, %v1558, 0
      %v1563 = vsel %vm282, %v1192, 0
      %v1566 = vsel %vm282, %v1193, 0
      %1568 = vmatprep.subr.mxu0 %v1566
      %1569 = vmatpush1.msra.mxu0 %v1563
      %1570 = vmatprep.subr.mxu0 0.0
      %1571 = vmatpush1.msra.mxu0 0.0
      %1572 = vmatprep.subr.mxu0 0.0
      %1573 = vmatpush1.msra.mxu0 0.0
      %1574 = vmatprep.subr.mxu0 0.0
      %1575 = vmatpush1.msra.mxu0 0.0
      %1576 = vmatprep.subr.mxu0 0.0
      %1577 = vmatpush1.msra.mxu0 0.0
      %1578 = vmatprep.subr.mxu0 0.0
      %1579 = vmatpush1.msra.mxu0 0.0
      %1580 = vmatprep.subr.mxu0 0.0
      %1581 = vmatpush1.msra.mxu0 0.0
      %1582 = vmatprep.subr.mxu0 0.0
      %1583 = vmatpush1.msra.mxu0 0.0
      %1584 = vmatprep.subr.mxu0 0.0
      %1585 = vmatpush1.msra.mxu0 0.0
      %1586 = vmatprep.subr.mxu0 0.0
      %1587 = vmatpush1.msra.mxu0 0.0
      %1588 = vmatprep.subr.mxu0 0.0
      %1589 = vmatpush1.msra.mxu0 0.0
      %1590 = vmatprep.subr.mxu0 0.0
      %1591 = vmatpush1.msra.mxu0 0.0
      %1592 = vmatprep.subr.mxu0 0.0
      %1593 = vmatpush1.msra.mxu0 0.0
      %1594 = vmatprep.subr.mxu0 0.0
      %1595 = vmatpush1.msra.mxu0 0.0
      %1596 = vmatprep.subr.mxu0 0.0
      %1597 = vmatpush1.msra.mxu0 0.0
      %1598 = vmatprep.subr.mxu0 0.0
      %1599 = vmatpush1.msra.mxu0 0.0
      %1600 = vmatprep.subr.mxu0 0.0
      %1601 = vmatpush1.msra.mxu0 0.0
      %1602 = vmatprep.subr.mxu0 0.0
      %1603 = vmatpush1.msra.mxu0 0.0
      %1604 = vmatprep.subr.mxu0 0.0
      %1605 = vmatpush1.msra.mxu0 0.0
      %1606 = vmatprep.subr.mxu0 0.0
      %1607 = vmatpush1.msra.mxu0 0.0
      %1608 = vmatprep.subr.mxu0 0.0
      %1609 = vmatpush1.msra.mxu0 0.0
      %1610 = vmatprep.subr.mxu0 0.0
      %1611 = vmatpush1.msra.mxu0 0.0
      %1612 = vmatprep.subr.mxu0 0.0
      %1613 = vmatpush1.msra.mxu0 0.0
      %1614 = vmatprep.subr.mxu0 0.0
      %1615 = vmatpush1.msra.mxu0 0.0
      %1616 = vmatprep.subr.mxu0 0.0
      %1617 = vmatpush1.msra.mxu0 0.0
      %1618 = vmatprep.subr.mxu0 0.0
      %1619 = vmatpush1.msra.mxu0 0.0
      %1620 = vmatprep.subr.mxu0 0.0
      %1621 = vmatpush1.msra.mxu0 0.0
      %1622 = vmatprep.subr.mxu0 0.0
      %1623 = vmatpush1.msra.mxu0 0.0
      %1624 = vmatprep.subr.mxu0 0.0
      %1625 = vmatpush1.msra.mxu0 0.0
      %1626 = vmatprep.subr.mxu0 0.0
      %1627 = vmatpush1.msra.mxu0 0.0
      %1628 = vmatprep.subr.mxu0 0.0
      %1629 = vmatpush1.msra.mxu0 0.0
      %1630 = vmatprep.subr.mxu0 0.0
      %1631 = vmatpush1.msra.mxu0 0.0
      %1632 = vmatprep.mubr.f32.mxu0 0.0
      %1633 = vmatmul.mubr.f32.gmra.mrb[0].mxu0 %v1560
      %v1634 = vpop.f32.mrb[0].mxu0
      %v1635 = vadd.f32 0.0, %v1634
      %v1636 = vpop.f32.mrb[0].mxu0
      %v1637 = vadd.f32 0.0, %v1636
      %1638 = vdwg.mxu0
      %v1639 = vadd.f32 %v1555, %v1635
      %v1640 = vadd.f32 %v1556, %v1637
      %1641 = vrot.lane.b32.xlu0 %v1192, 127
      %v1642 = vpop.permute.xlu0 %1641
      %1643 = vrot.lane.b32.xlu0 %v1193, 127
      %v1644 = vpop.permute.xlu0 %1643
      %v1645 = vsel %vm738, %v1642, %v1644
      %v1646 = vsel %vm738, %v1644, %v1642
      %v1647 = vmul.f32 %v1645, %v747
      %v1648 = vmul.f32 %v1646, %v751
      %s1649 = scalar_lea.vmem %s2, 20
      %v1650 = vld [vmem:[%s1649] sm:$0xf]
      %v1652 = vsel %vm278, %v1650, 0
      %v1655 = vsel %vm282, %v1647, 0
      %v1658 = vsel %vm282, %v1648, 0
      %1660 = vmatprep.subr.mxu0 %v1658
      %1661 = vmatpush1.msra.mxu0 %v1655
      %1662 = vmatprep.subr.mxu0 0.0
      %1663 = vmatpush1.msra.mxu0 0.0
      %1664 = vmatprep.subr.mxu0 0.0
      %1665 = vmatpush1.msra.mxu0 0.0
      %1666 = vmatprep.subr.mxu0 0.0
      %1667 = vmatpush1.msra.mxu0 0.0
      %1668 = vmatprep.subr.mxu0 0.0
      %1669 = vmatpush1.msra.mxu0 0.0
      %1670 = vmatprep.subr.mxu0 0.0
      %1671 = vmatpush1.msra.mxu0 0.0
      %1672 = vmatprep.subr.mxu0 0.0
      %1673 = vmatpush1.msra.mxu0 0.0
      %1674 = vmatprep.subr.mxu0 0.0
      %1675 = vmatpush1.msra.mxu0 0.0
      %1676 = vmatprep.subr.mxu0 0.0
      %1677 = vmatpush1.msra.mxu0 0.0
      %1678 = vmatprep.subr.mxu0 0.0
      %1679 = vmatpush1.msra.mxu0 0.0
      %1680 = vmatprep.subr.mxu0 0.0
      %1681 = vmatpush1.msra.mxu0 0.0
      %1682 = vmatprep.subr.mxu0 0.0
      %1683 = vmatpush1.msra.mxu0 0.0
      %1684 = vmatprep.subr.mxu0 0.0
      %1685 = vmatpush1.msra.mxu0 0.0
      %1686 = vmatprep.subr.mxu0 0.0
      %1687 = vmatpush1.msra.mxu0 0.0
      %1688 = vmatprep.subr.mxu0 0.0
      %1689 = vmatpush1.msra.mxu0 0.0
      %1690 = vmatprep.subr.mxu0 0.0
      %1691 = vmatpush1.msra.mxu0 0.0
      %1692 = vmatprep.subr.mxu0 0.0
      %1693 = vmatpush1.msra.mxu0 0.0
      %1694 = vmatprep.subr.mxu0 0.0
      %1695 = vmatpush1.msra.mxu0 0.0
      %1696 = vmatprep.subr.mxu0 0.0
      %1697 = vmatpush1.msra.mxu0 0.0
      %1698 = vmatprep.subr.mxu0 0.0
      %1699 = vmatpush1.msra.mxu0 0.0
      %1700 = vmatprep.subr.mxu0 0.0
      %1701 = vmatpush1.msra.mxu0 0.0
      %1702 = vmatprep.subr.mxu0 0.0
      %1703 = vmatpush1.msra.mxu0 0.0
      %1704 = vmatprep.subr.mxu0 0.0
      %1705 = vmatpush1.msra.mxu0 0.0
      %1706 = vmatprep.subr.mxu0 0.0
      %1707 = vmatpush1.msra.mxu0 0.0
      %1708 = vmatprep.subr.mxu0 0.0
      %1709 = vmatpush1.msra.mxu0 0.0
      %1710 = vmatprep.subr.mxu0 0.0
      %1711 = vmatpush1.msra.mxu0 0.0
      %1712 = vmatprep.subr.mxu0 0.0
      %1713 = vmatpush1.msra.mxu0 0.0
      %1714 = vmatprep.subr.mxu0 0.0
      %1715 = vmatpush1.msra.mxu0 0.0
      %1716 = vmatprep.subr.mxu0 0.0
      %1717 = vmatpush1.msra.mxu0 0.0
      %1718 = vmatprep.subr.mxu0 0.0
      %1719 = vmatpush1.msra.mxu0 0.0
      %1720 = vmatprep.subr.mxu0 0.0
      %1721 = vmatpush1.msra.mxu0 0.0
      %1722 = vmatprep.subr.mxu0 0.0
      %1723 = vmatpush1.msra.mxu0 0.0
      %1724 = vmatprep.mubr.f32.mxu0 0.0
      %1725 = vmatmul.mubr.f32.gmra.mrb[0].mxu0 %v1652
      %v1726 = vpop.f32.mrb[0].mxu0
      %v1727 = vadd.f32 0.0, %v1726
      %v1728 = vpop.f32.mrb[0].mxu0
      %v1729 = vadd.f32 0.0, %v1728
      %1730 = vdwg.mxu0
      %v1731 = vadd.f32 %v1639, %v1727
      %v1732 = vadd.f32 %v1640, %v1729
      %1733 = vrot.lane.b32.xlu0 %v1192, 113
      %v1734 = vpop.permute.xlu0 %1733
      %1735 = vrot.lane.b32.xlu0 %v1193, 113
      %v1736 = vpop.permute.xlu0 %1735
      %v1737 = vsel %vm844, %v1734, %v1736
      %v1738 = vsel %vm844, %v1736, %v1734
      %v1739 = vmul.f32 %v1737, %v853
      %v1740 = vmul.f32 %v1738, %v857
      %s1741 = scalar_lea.vmem %s2, 24
      %v1742 = vld [vmem:[%s1741] sm:$0xf]
      %v1744 = vsel %vm278, %v1742, 0
      %v1747 = vsel %vm282, %v1739, 0
      %v1750 = vsel %vm282, %v1740, 0
      %1752 = vmatprep.subr.mxu0 %v1750
      %1753 = vmatpush1.msra.mxu0 %v1747
      %1754 = vmatprep.subr.mxu0 0.0
      %1755 = vmatpush1.msra.mxu0 0.0
      %1756 = vmatprep.subr.mxu0 0.0
      %1757 = vmatpush1.msra.mxu0 0.0
      %1758 = vmatprep.subr.mxu0 0.0
      %1759 = vmatpush1.msra.mxu0 0.0
      %1760 = vmatprep.subr.mxu0 0.0
      %1761 = vmatpush1.msra.mxu0 0.0
      %1762 = vmatprep.subr.mxu0 0.0
      %1763 = vmatpush1.msra.mxu0 0.0
      %1764 = vmatprep.subr.mxu0 0.0
      %1765 = vmatpush1.msra.mxu0 0.0
      %1766 = vmatprep.subr.mxu0 0.0
      %1767 = vmatpush1.msra.mxu0 0.0
      %1768 = vmatprep.subr.mxu0 0.0
      %1769 = vmatpush1.msra.mxu0 0.0
      %1770 = vmatprep.subr.mxu0 0.0
      %1771 = vmatpush1.msra.mxu0 0.0
      %1772 = vmatprep.subr.mxu0 0.0
      %1773 = vmatpush1.msra.mxu0 0.0
      %1774 = vmatprep.subr.mxu0 0.0
      %1775 = vmatpush1.msra.mxu0 0.0
      %1776 = vmatprep.subr.mxu0 0.0
      %1777 = vmatpush1.msra.mxu0 0.0
      %1778 = vmatprep.subr.mxu0 0.0
      %1779 = vmatpush1.msra.mxu0 0.0
      %1780 = vmatprep.subr.mxu0 0.0
      %1781 = vmatpush1.msra.mxu0 0.0
      %1782 = vmatprep.subr.mxu0 0.0
      %1783 = vmatpush1.msra.mxu0 0.0
      %1784 = vmatprep.subr.mxu0 0.0
      %1785 = vmatpush1.msra.mxu0 0.0
      %1786 = vmatprep.subr.mxu0 0.0
      %1787 = vmatpush1.msra.mxu0 0.0
      %1788 = vmatprep.subr.mxu0 0.0
      %1789 = vmatpush1.msra.mxu0 0.0
      %1790 = vmatprep.subr.mxu0 0.0
      %1791 = vmatpush1.msra.mxu0 0.0
      %1792 = vmatprep.subr.mxu0 0.0
      %1793 = vmatpush1.msra.mxu0 0.0
      %1794 = vmatprep.subr.mxu0 0.0
      %1795 = vmatpush1.msra.mxu0 0.0
      %1796 = vmatprep.subr.mxu0 0.0
      %1797 = vmatpush1.msra.mxu0 0.0
      %1798 = vmatprep.subr.mxu0 0.0
      %1799 = vmatpush1.msra.mxu0 0.0
      %1800 = vmatprep.subr.mxu0 0.0
      %1801 = vmatpush1.msra.mxu0 0.0
      %1802 = vmatprep.subr.mxu0 0.0
      %1803 = vmatpush1.msra.mxu0 0.0
      %1804 = vmatprep.subr.mxu0 0.0
      %1805 = vmatpush1.msra.mxu0 0.0
      %1806 = vmatprep.subr.mxu0 0.0
      %1807 = vmatpush1.msra.mxu0 0.0
      %1808 = vmatprep.subr.mxu0 0.0
      %1809 = vmatpush1.msra.mxu0 0.0
      %1810 = vmatprep.subr.mxu0 0.0
      %1811 = vmatpush1.msra.mxu0 0.0
      %1812 = vmatprep.subr.mxu0 0.0
      %1813 = vmatpush1.msra.mxu0 0.0
      %1814 = vmatprep.subr.mxu0 0.0
      %1815 = vmatpush1.msra.mxu0 0.0
      %1816 = vmatprep.mubr.f32.mxu0 0.0
      %1817 = vmatmul.mubr.f32.gmra.mrb[0].mxu0 %v1744
      %v1818 = vpop.f32.mrb[0].mxu0
      %v1819 = vadd.f32 0.0, %v1818
      %v1820 = vpop.f32.mrb[0].mxu0
      %v1821 = vadd.f32 0.0, %v1820
      %1822 = vdwg.mxu0
      %v1823 = vadd.f32 %v1731, %v1819
      %v1824 = vadd.f32 %v1732, %v1821
      %1825 = vrot.lane.b32.xlu0 %v1192, 112
      %v1826 = vpop.permute.xlu0 %1825
      %1827 = vrot.lane.b32.xlu0 %v1193, 112
      %v1828 = vpop.permute.xlu0 %1827
      %v1829 = vsel %vm950, %v1826, %v1828
      %v1830 = vsel %vm950, %v1828, %v1826
      %v1831 = vmul.f32 %v1829, %v959
      %v1832 = vmul.f32 %v1830, %v963
      %s1833 = scalar_lea.vmem %s2, 28
      %v1834 = vld [vmem:[%s1833] sm:$0xf]
      %v1836 = vsel %vm278, %v1834, 0
      %v1839 = vsel %vm282, %v1831, 0
      %v1842 = vsel %vm282, %v1832, 0
      %1844 = vmatprep.subr.mxu0 %v1842
      %1845 = vmatpush1.msra.mxu0 %v1839
      %1846 = vmatprep.subr.mxu0 0.0
      %1847 = vmatpush1.msra.mxu0 0.0
      %1848 = vmatprep.subr.mxu0 0.0
      %1849 = vmatpush1.msra.mxu0 0.0
      %1850 = vmatprep.subr.mxu0 0.0
      %1851 = vmatpush1.msra.mxu0 0.0
      %1852 = vmatprep.subr.mxu0 0.0
      %1853 = vmatpush1.msra.mxu0 0.0
      %1854 = vmatprep.subr.mxu0 0.0
      %1855 = vmatpush1.msra.mxu0 0.0
      %1856 = vmatprep.subr.mxu0 0.0
      %1857 = vmatpush1.msra.mxu0 0.0
      %1858 = vmatprep.subr.mxu0 0.0
      %1859 = vmatpush1.msra.mxu0 0.0
      %1860 = vmatprep.subr.mxu0 0.0
      %1861 = vmatpush1.msra.mxu0 0.0
      %1862 = vmatprep.subr.mxu0 0.0
      %1863 = vmatpush1.msra.mxu0 0.0
      %1864 = vmatprep.subr.mxu0 0.0
      %1865 = vmatpush1.msra.mxu0 0.0
      %1866 = vmatprep.subr.mxu0 0.0
      %1867 = vmatpush1.msra.mxu0 0.0
      %1868 = vmatprep.subr.mxu0 0.0
      %1869 = vmatpush1.msra.mxu0 0.0
      %1870 = vmatprep.subr.mxu0 0.0
      %1871 = vmatpush1.msra.mxu0 0.0
      %1872 = vmatprep.subr.mxu0 0.0
      %1873 = vmatpush1.msra.mxu0 0.0
      %1874 = vmatprep.subr.mxu0 0.0
      %1875 = vmatpush1.msra.mxu0 0.0
      %1876 = vmatprep.subr.mxu0 0.0
      %1877 = vmatpush1.msra.mxu0 0.0
      %1878 = vmatprep.subr.mxu0 0.0
      %1879 = vmatpush1.msra.mxu0 0.0
      %1880 = vmatprep.subr.mxu0 0.0
      %1881 = vmatpush1.msra.mxu0 0.0
      %1882 = vmatprep.subr.mxu0 0.0
      %1883 = vmatpush1.msra.mxu0 0.0
      %1884 = vmatprep.subr.mxu0 0.0
      %1885 = vmatpush1.msra.mxu0 0.0
      %1886 = vmatprep.subr.mxu0 0.0
      %1887 = vmatpush1.msra.mxu0 0.0
      %1888 = vmatprep.subr.mxu0 0.0
      %1889 = vmatpush1.msra.mxu0 0.0
      %1890 = vmatprep.subr.mxu0 0.0
      %1891 = vmatpush1.msra.mxu0 0.0
      %1892 = vmatprep.subr.mxu0 0.0
      %1893 = vmatpush1.msra.mxu0 0.0
      %1894 = vmatprep.subr.mxu0 0.0
      %1895 = vmatpush1.msra.mxu0 0.0
      %1896 = vmatprep.subr.mxu0 0.0
      %1897 = vmatpush1.msra.mxu0 0.0
      %1898 = vmatprep.subr.mxu0 0.0
      %1899 = vmatpush1.msra.mxu0 0.0
      %1900 = vmatprep.subr.mxu0 0.0
      %1901 = vmatpush1.msra.mxu0 0.0
      %1902 = vmatprep.subr.mxu0 0.0
      %1903 = vmatpush1.msra.mxu0 0.0
      %1904 = vmatprep.subr.mxu0 0.0
      %1905 = vmatpush1.msra.mxu0 0.0
      %1906 = vmatprep.subr.mxu0 0.0
      %1907 = vmatpush1.msra.mxu0 0.0
      %1908 = vmatprep.mubr.f32.mxu0 0.0
      %1909 = vmatmul.mubr.f32.gmra.mrb[0].mxu0 %v1836
      %v1910 = vpop.f32.mrb[0].mxu0
      %v1911 = vadd.f32 0.0, %v1910
      %v1912 = vpop.f32.mrb[0].mxu0
      %v1913 = vadd.f32 0.0, %v1912
      %1914 = vdwg.mxu0
      %v1915 = vadd.f32 %v1823, %v1911
      %v1916 = vadd.f32 %v1824, %v1913
      %1917 = vrot.lane.b32.xlu0 %v1192, 111
      %v1918 = vpop.permute.xlu0 %1917
      %1919 = vrot.lane.b32.xlu0 %v1193, 111
      %v1920 = vpop.permute.xlu0 %1919
      %v1921 = vsel %vm1056, %v1918, %v1920
      %v1922 = vsel %vm1056, %v1920, %v1918
      %v1923 = vmul.f32 %v1921, %v1065
      %v1924 = vmul.f32 %v1922, %v1069
      %s1925 = scalar_lea.vmem %s2, 32
      %v1926 = vld [vmem:[%s1925] sm:$0xf]
      %v1928 = vsel %vm278, %v1926, 0
      %v1931 = vsel %vm282, %v1923, 0
      %v1934 = vsel %vm282, %v1924, 0
      %1936 = vmatprep.subr.mxu0 %v1934
      %1937 = vmatpush1.msra.mxu0 %v1931
      %1938 = vmatprep.subr.mxu0 0.0
      %1939 = vmatpush1.msra.mxu0 0.0
      %1940 = vmatprep.subr.mxu0 0.0
      %1941 = vmatpush1.msra.mxu0 0.0
      %1942 = vmatprep.subr.mxu0 0.0
      %1943 = vmatpush1.msra.mxu0 0.0
      %1944 = vmatprep.subr.mxu0 0.0
      %1945 = vmatpush1.msra.mxu0 0.0
      %1946 = vmatprep.subr.mxu0 0.0
      %1947 = vmatpush1.msra.mxu0 0.0
      %1948 = vmatprep.subr.mxu0 0.0
      %1949 = vmatpush1.msra.mxu0 0.0
      %1950 = vmatprep.subr.mxu0 0.0
      %1951 = vmatpush1.msra.mxu0 0.0
      %1952 = vmatprep.subr.mxu0 0.0
      %1953 = vmatpush1.msra.mxu0 0.0
      %1954 = vmatprep.subr.mxu0 0.0
      %1955 = vmatpush1.msra.mxu0 0.0
      %1956 = vmatprep.subr.mxu0 0.0
      %1957 = vmatpush1.msra.mxu0 0.0
      %1958 = vmatprep.subr.mxu0 0.0
      %1959 = vmatpush1.msra.mxu0 0.0
      %1960 = vmatprep.subr.mxu0 0.0
      %1961 = vmatpush1.msra.mxu0 0.0
      %1962 = vmatprep.subr.mxu0 0.0
      %1963 = vmatpush1.msra.mxu0 0.0
      %1964 = vmatprep.subr.mxu0 0.0
      %1965 = vmatpush1.msra.mxu0 0.0
      %1966 = vmatprep.subr.mxu0 0.0
      %1967 = vmatpush1.msra.mxu0 0.0
      %1968 = vmatprep.subr.mxu0 0.0
      %1969 = vmatpush1.msra.mxu0 0.0
      %1970 = vmatprep.subr.mxu0 0.0
      %1971 = vmatpush1.msra.mxu0 0.0
      %1972 = vmatprep.subr.mxu0 0.0
      %1973 = vmatpush1.msra.mxu0 0.0
      %1974 = vmatprep.subr.mxu0 0.0
      %1975 = vmatpush1.msra.mxu0 0.0
      %1976 = vmatprep.subr.mxu0 0.0
      %1977 = vmatpush1.msra.mxu0 0.0
      %1978 = vmatprep.subr.mxu0 0.0
      %1979 = vmatpush1.msra.mxu0 0.0
      %1980 = vmatprep.subr.mxu0 0.0
      %1981 = vmatpush1.msra.mxu0 0.0
      %1982 = vmatprep.subr.mxu0 0.0
      %1983 = vmatpush1.msra.mxu0 0.0
      %1984 = vmatprep.subr.mxu0 0.0
      %1985 = vmatpush1.msra.mxu0 0.0
      %1986 = vmatprep.subr.mxu0 0.0
      %1987 = vmatpush1.msra.mxu0 0.0
      %1988 = vmatprep.subr.mxu0 0.0
      %1989 = vmatpush1.msra.mxu0 0.0
      %1990 = vmatprep.subr.mxu0 0.0
      %1991 = vmatpush1.msra.mxu0 0.0
      %1992 = vmatprep.subr.mxu0 0.0
      %1993 = vmatpush1.msra.mxu0 0.0
      %1994 = vmatprep.subr.mxu0 0.0
      %1995 = vmatpush1.msra.mxu0 0.0
      %1996 = vmatprep.subr.mxu0 0.0
      %1997 = vmatpush1.msra.mxu0 0.0
      %1998 = vmatprep.subr.mxu0 0.0
      %1999 = vmatpush1.msra.mxu0 0.0
      %2000 = vmatprep.mubr.f32.mxu0 0.0
      %2001 = vmatmul.mubr.f32.gmra.mrb[0].mxu0 %v1928
      %v2002 = vpop.f32.mrb[0].mxu0
      %v2003 = vadd.f32 0.0, %v2002
      %v2004 = vpop.f32.mrb[0].mxu0
      %v2005 = vadd.f32 0.0, %v2004
      %2006 = vdwg.mxu0
      %v2007 = vadd.f32 %v1915, %v2003
      %v2008 = vadd.f32 %v1916, %v2005
      %v2009 = vsel %vm282, %v2007, 0.0
      %v2010 = vsel %vm282, %v2008, 0.0
      %v2011 = vadd.f32 %v2009, %v2010
      %2012 = vadd.xlane.f32.xlu0 %v2011
      %v2013 = vpop.xlane.xlu0 %2012
      %v2014 = vmul.f32 %v2013, %v1163
      %v2015 = vsub.f32 %v2007, %v2014
      %v2016 = vsub.f32 %v2008, %v2014
      %v2017 = vmul.f32 %v2015, %v2015
      %v2018 = vmul.f32 %v2016, %v2016
      %v2019 = vsel %vm282, %v2017, 0.0
      %v2020 = vsel %vm282, %v2018, 0.0
      %v2021 = vadd.f32 %v2019, %v2020
      %2022 = vadd.xlane.f32.xlu0 %v2021
      %v2023 = vpop.xlane.xlu0 %2022
      %v2024 = vmul.f32 %v2023, %v1163
      %v2025 = vadd.f32 %v2024, 1e-05
      %v2026 = vrsqrt.pop %v2025
      %v2027 = vmul.f32 %v2015, %v2026
      %v2028 = vmul.f32 %v2016, %v2026
      %2029 = vset.pattern.permute.xlu0 2
      %2030 = vperm.xlu0 %2029, %v226
      %v2031 = vpop.permute.xlu0 %2030
      %v2033 = vmul.f32 %v2027, %v2031
      %v2034 = vmul.f32 %v2028, %v2031
      %2035 = vset.pattern.permute.xlu0 3
      %2036 = vperm.xlu0 %2035, %v226
      %v2037 = vpop.permute.xlu0 %2036
      %v2039 = vadd.f32 %v2033, %v2037
      %v2040 = vadd.f32 %v2034, %v2037
      %v2043 = vcombine.low %v2039, %v2040
      %v2045 = vadd.f32 %v225, %v2043
      %v2046 = vmax.f32 %v2045, 0.0
      %2047 = vst [vmem:[%s224] sm:$0xff] %v2046
      %p2048 = scmp.lt.s32.totalorder %s16, 1
      %s2049 = scalar_select %p2048, %s16, 1
      %s2050 = smul.addr %s2049, 2
      %s2051 = smul.addr %s2050, 4
      %s2052 = scalar_lea.vmem %s5, %s2051
      // Predicated region
      $region41: #{residual_block.1} parent=39 // pred_check
        %p2053 = pneg %p144
      $region42: #{residual_block.1} parent=39 // pred_check_branch
        %2055 = sbr.rel (%p2053) target = $region44
      $region43: #{residual_block.1} parent=39 // pred_region
        _
      $region44: #{residual_block.1} parent=39 // pred_fallthru
        _
    $region40: #{residual_block.1} parent=5 // pred_fallthru
      _
    %p2056 = scmp.le.s32.totalorder 2, %s11
    // Predicated region
    $region45: #{residual_block.1} parent=5 // pred_check
      %p2057 = pneg %p2056
    $region46: #{residual_block.1} parent=5 // pred_check_branch
      %2059 = sbr.rel (%p2057) target = $region48
    $region47: #{residual_block.1} parent=5 // pred_region
      %s2060 = ssub.s32 %s11, 2
      // Predicated region
      $region49: #{residual_block.1} parent=47 // pred_check
        %p2061 = pneg %p150
      $region50: #{residual_block.1} parent=47 // pred_check_branch
        %2063 = sbr.rel (%p2061) target = $region52
      $region51: #{residual_block.1} parent=47 // pred_region
        %p2064 = scmp.lt.s32.totalorder %s17, 1
        %s2065 = scalar_select %p2064, %s17, 1
        %s2066 = smul.addr %s2065, 2
        %s2067 = smul.addr %s2066, 4
        %s2068 = scalar_lea.vmem %s5, %s2067
      $region52: #{residual_block.1} parent=47 // pred_fallthru
        _
    $region48: #{residual_block.1} parent=5 // pred_fallthru
      _
  $region6: #{residual_block.1} parent=0 // loop_footer
    %s15 = sadd.s32 1, %s11
  $region7: #{residual_block.1} parent=0 // loop_footer_branch
    %10 = sbr.rel target = $region3
  $region8: #{residual_block.1} parent=0 // loop_exit
    _

</llo_original>
